<compile_context>
chip_gen: v7x
topology: tpu7x:2x2x1
jax: 0.10.0
libtpu: 0.0.40
codegen_flags: <defaults>
</compile_context>

<pallas_src>
import math
import functools

import jax
import jax.numpy as jnp
from jax import lax
from jax.experimental import pallas as pl
from jax.experimental.pallas import tpu as pltpu


def _round_up(x, m):
    return ((x + m - 1) // m) * m


def _pick_tile(padded_dim, max_tile, align):
    """Largest multiple of `align` <= max_tile that divides padded_dim."""
    t = min(max_tile, padded_dim)
    t = max((t // align) * align, align)
    while t > align and padded_dim % t:
        t -= align
    return t


# --------------------------------------------------------------------------
# Fused mapping network: PixelNorm + n_fc x (SLinear + LeakyReLU(0.2))
# One pallas_call; grid axis = layer index; activation resident in VMEM.
# --------------------------------------------------------------------------
def _mapping_kernel(z_ref, w_ref, b_ref, o_ref, act_ref, *, scale, neg_slope, eps):
    l = pl.program_id(0)

    # Layer 0: fuse PixelNorm of the latent code into the kernel.
    @pl.when(l == 0)
    def _():
        x0 = z_ref[...].astype(jnp.float32)
        act_ref[...] = x0 * lax.rsqrt(
            jnp.mean(x0 * x0, axis=1, keepdims=True) + eps)

    # (B, D) @ (D, D) with the pre-transposed (dim_in, dim_out) bf16 weight:
    # plain NN contraction -> no hidden XLU transpose; f32 accumulation.
    x = act_ref[...].astype(w_ref.dtype)
    acc = lax.dot_general(
        x, w_ref[0],
        dimension_numbers=(((1,), (0,)), ((), ())),
        preferred_element_type=jnp.float32)

    # Equalized-LR scale on the small accumulator, bias in f32, fused LeakyReLU.
    y = acc * scale + b_ref[0].astype(jnp.float32)
    y = jnp.where(y >= 0, y, neg_slope * y)
    act_ref[...] = y

    @pl.when(l == pl.num_programs(0) - 1)
    def _():
        o_ref[...] = y.astype(o_ref.dtype)


def intermediate_generator_forward(latent_z, w_stack_t, b_stack):
    """Fused Intermediate_Generator forward.

    latent_z : (B, D)        f32 latent code
    w_stack_t: (n_fc, D, D)  layer-l slice = weight_orig[l].T (dim_in, dim_out), bf16
    b_stack  : (n_fc, 1, D)  f32 biases
    """
    B, D = latent_z.shape
    n_fc = w_stack_t.shape[0]
    assert D % 128 == 0, "dim_latent must be a multiple of 128"
    scale = math.sqrt(2.0 / D)  # fan_in = dim_in for a 2-D Linear weight

    wbytes = jnp.dtype(w_stack_t.dtype).itemsize
    cost = pl.CostEstimate(
        flops=2 * B * D * D * n_fc,
        transcendentals=B,
        bytes_accessed=(n_fc * D * D * wbytes      # each layer weight once
                        + n_fc * D * 4             # biases
                        + 2 * B * D * 4))          # latent in + out

    kernel = functools.partial(_mapping_kernel, scale=scale,
                               neg_slope=0.2, eps=1e-8)

    return pl.pallas_call(
        kernel,
        out_shape=jax.ShapeDtypeStruct((B, D), jnp.float32),
        grid_spec=pltpu.PrefetchScalarGridSpec(
            num_scalar_prefetch=0,
            grid=(n_fc,),                               # sequential over layers
            in_specs=[
                pl.BlockSpec((B, D), lambda l: (0, 0)),        # latent (resident)
                pl.BlockSpec((1, D, D), lambda l: (l, 0, 0)),  # layer-l weight
                pl.BlockSpec((1, 1, D), lambda l: (l, 0, 0)),  # layer-l bias
            ],
            out_specs=pl.BlockSpec((B, D), lambda l: (0, 0)),  # resident output
            scratch_shapes=[pltpu.VMEM((B, D), jnp.float32)],  # carried activation
        ),
        compiler_params=pltpu.CompilerParams(
            dimension_semantics=("arbitrary",)),  # layers are sequentially dependent
        cost_estimate=cost,
    )(latent_z, w_stack_t, b_stack)


# --------------------------------------------------------------------------
# Single SLinear (used for FC_A affine), activation optionally fused.
# --------------------------------------------------------------------------
def _slinear_kernel(x_ref, w_ref, b_ref, o_ref, *, scale, neg_slope):
    """x_ref (B, tk) @ w_ref (tk, tn) accumulated directly into f32 o_ref."""
    k = pl.program_id(1)

    @pl.when(k == 0)
    def _():
        o_ref[...] = jnp.zeros_like(o_ref)

    o_ref[...] += lax.dot_general(
        x_ref[...].astype(w_ref.dtype), w_ref[...],
        dimension_numbers=(((1,), (0,)), ((), ())),
        preferred_element_type=jnp.float32)

    @pl.when(k == pl.num_programs(1) - 1)
    def _():
        y = o_ref[...] * scale + b_ref[...].astype(jnp.float32)
        if neg_slope is not None:
            y = jnp.where(y >= 0, y, neg_slope * y)
        o_ref[...] = y


def slinear_forward(x, weight_t, bias, *, fan_in=None, neg_slope=None):
    """Equalized-LR linear: x @ (W * sqrt(2/fan_in)).T + b.

    x:        (B, K)  activations (any float dtype; cast to weight dtype for MXU)
    weight_t: (K, N)  PyTorch weight transposed ONCE at parameter setup (bf16)
    bias:     (N,)    f32
    """
    B, K = x.shape
    Kw, N = weight_t.shape
    assert Kw == K
    fan_in = K if fan_in is None else fan_in
    scale = math.sqrt(2.0 / fan_in)

    # Lane-align K/N only; no batch padding (block M dim = true batch).
    Kp = _round_up(K, 128)
    Np = _round_up(N, 128)
    tn = _pick_tile(Np, 256, 128)
    tk = _pick_tile(Kp, 512, 128)

    xp = x if Kp == K else jnp.pad(x, ((0, 0), (0, Kp - K)))
    wp = weight_t if (Kp == K and Np == N) else jnp.pad(
        weight_t, ((0, Kp - K), (0, Np - N)))
    b2d = bias.reshape(1, N)
    bp = b2d if Np == N else jnp.pad(b2d, ((0, 0), (0, Np - N)))

    grid = (Np // tn, Kp // tk)   # reduction (K) axis last

    wbytes = jnp.dtype(weight_t.dtype).itemsize
    xbytes = jnp.dtype(x.dtype).itemsize
    cost = pl.CostEstimate(
        flops=2 * B * Kp * Np,
        transcendentals=0,
        bytes_accessed=((Np // tn) * B * Kp * xbytes   # x re-read per N tile
                        + Kp * Np * wbytes             # each weight tile once
                        + Np * 4                       # bias
                        + B * Np * 4))                 # output writeback

    kernel = functools.partial(_slinear_kernel, scale=scale, neg_slope=neg_slope)

    out = pl.pallas_call(
        kernel,
        out_shape=jax.ShapeDtypeStruct((B, Np), jnp.float32),
        grid_spec=pltpu.PrefetchScalarGridSpec(
            num_scalar_prefetch=0,
            grid=grid,
            in_specs=[
                pl.BlockSpec((B, tk), lambda j, k: (0, k)),   # x
                pl.BlockSpec((tk, tn), lambda j, k: (k, j)),  # weight (K, N)
                pl.BlockSpec((1, tn), lambda j, k: (0, j)),   # bias
            ],
            out_specs=pl.BlockSpec((B, tn), lambda j, k: (0, j)),
        ),
        compiler_params=pltpu.CompilerParams(
            dimension_semantics=("parallel", "arbitrary")),   # N parallel (v7x megacore)
        cost_estimate=cost,
    )(xp, wp, bp)

    return out if Np == N else out[:, :N]


# --------------------------------------------------------------------------
# One-time parameter preparation (transpose + bf16 cast, amortized over calls).
# --------------------------------------------------------------------------
def prepare_mapping_params(weights, biases, weight_dtype=jnp.bfloat16):
    w_stack_t = jnp.stack([w.T.astype(weight_dtype) for w in weights])       # (n_fc, D, D)
    b_stack = jnp.stack([b.reshape(1, -1).astype(jnp.float32) for b in biases])  # (n_fc, 1, D)
    return w_stack_t, b_stack


def prepare_slinear_params(weight_orig, bias, weight_dtype=jnp.bfloat16):
    return weight_orig.T.astype(weight_dtype), bias.astype(jnp.float32)


if __name__ == "__main__":
    key = jax.random.PRNGKey(0)

    batch = 2
    dim_latent = 512     # Generator_with_Ada default latent size
    n_fc = 3             # small version of the n_fc=8 mapping network
    conv_dim = 64        # layer0 channel count -> FC_A outputs 2*conv_dim

    keys = jax.random.split(key, n_fc + 2)
    latent_z = jax.random.normal(keys[0], (batch, dim_latent), jnp.float32)

    # Mapping-network parameters: normal weights (PyTorch layout), zero bias.
    map_ws = [jax.random.normal(keys[1 + i], (dim_latent, dim_latent), jnp.float32)
              for i in range(n_fc)]
    map_bs = [jnp.zeros((dim_latent,), jnp.float32) for _ in range(n_fc)]

    # FC_A affine: SLinear(dim_latent, 2*conv_dim), bias = [1]*C ++ [0]*C.
    fca_w = jax.random.normal(keys[1 + n_fc], (2 * conv_dim, dim_latent), jnp.float32)
    fca_b = jnp.concatenate([jnp.ones((conv_dim,), jnp.float32),
                             jnp.zeros((conv_dim,), jnp.float32)])

    # One-time transpose + bf16 cast (weight streaming is the dominant HBM traffic).
    map_wt, map_bst = prepare_mapping_params(map_ws, map_bs)
    fca_wt, fca_bt = prepare_slinear_params(fca_w, fca_b)

    @jax.jit
    def forward(z, mwt, mbs, fwt, fbt):
        w = intermediate_generator_forward(z, mwt, mbs)
        style = slinear_forward(w, fwt, fbt, fan_in=dim_latent)
        return w, style

    latent_w, style = forward(latent_z, map_wt, map_bst, fca_wt, fca_bt)
    latent_w, style = jax.block_until_ready((latent_w, style))

    # ---- references -------------------------------------------------------
    scale = math.sqrt(2.0 / dim_latent)

    def pixel_norm(x):
        return x / jnp.sqrt(jnp.mean(x * x, axis=1, keepdims=True) + 1e-8)

    def leaky(x):
        return jnp.where(x >= 0, x, 0.2 * x)

    def matmul_bf16(x, wt):  # same math as the kernels: bf16 MXU inputs, f32 acc
        return lax.dot_general(x.astype(jnp.bfloat16), wt,
                               dimension_numbers=(((1,), (0,)), ((), ())),
                               preferred_element_type=jnp.float32)

    # bf16-matched reference (checks the kernel math exactly).
    w_bf = pixel_norm(latent_z)
    for l in range(n_fc):
        w_bf = leaky(matmul_bf16(w_bf, map_wt[l]) * scale + map_bst[l])
    style_bf = matmul_bf16(w_bf, fca_wt) * scale + fca_bt.reshape(1, -1)

    # f32 PyTorch-faithful reference (tolerance loosened for bf16 weights).
    w_f32 = pixel_norm(latent_z)
    for W, b in zip(map_ws, map_bs):
        w_f32 = leaky(w_f32 @ (W * scale).T + b)
    style_f32 = w_f32 @ (fca_w * scale).T + fca_b

    assert jnp.allclose(latent_w, w_bf, atol=1e-2, rtol=1e-2), "mapping != bf16 ref"
    assert jnp.allclose(style, style_bf, atol=1e-2, rtol=1e-2), "style != bf16 ref"
    assert jnp.allclose(latent_w, w_f32, atol=0.25, rtol=0.1), "mapping drift vs f32 ref"
    assert jnp.allclose(style, style_f32, atol=0.25, rtol=0.1), "style drift vs f32 ref"

    print("KERNEL_OK")
</pallas_src>

<mosaic_0001>
module attributes {stable_mosaic.version = 11 : i64} {
  func.func @_slinear_kernel(%arg0: i32, %arg1: i32, %arg2: memref<2x512xf32, #tpu.memory_space<vmem>>, %arg3: memref<512x128xbf16, #tpu.memory_space<vmem>>, %arg4: memref<1x128xf32, #tpu.memory_space<vmem>>, %arg5: memref<2x128xf32, #tpu.memory_space<vmem>>) attributes {dimension_semantics = [#tpu.dimension_semantics<parallel>, #tpu.dimension_semantics<arbitrary>], iteration_bounds = array<i64: 1, 1>, scalar_prefetch = 0 : i64, scratch_operands = 0 : i64, tpu.core_type = #tpu.core_type<tc>, window_params = [{transform_indices = @transform_0, window_bounds = array<i64: 2, 512>}, {transform_indices = @transform_1, window_bounds = array<i64: 512, 128>}, {transform_indices = @transform_2, window_bounds = array<i64: 1, 128>}, {transform_indices = @transform_3, window_bounds = array<i64: 2, 128>}]} {
    %c0_i32 = arith.constant 0 : i32
    %0 = arith.cmpi eq, %arg1, %c0_i32 : i32
    %1 = arith.extui %0 : i1 to i32
    %c0_i32_0 = arith.constant 0 : i32
    %2 = arith.cmpi ne, %1, %c0_i32_0 : i32
    scf.if %2 {
      %cst_10 = arith.constant 0.000000e+00 : f32
      %13 = vector.broadcast %cst_10 : f32 to vector<2x128xf32>
      %c0_11 = arith.constant 0 : index
      %c0_12 = arith.constant 0 : index
      %14 = vector.load %arg5[%c0_11, %c0_12] : memref<2x128xf32, #tpu.memory_space<vmem>>, vector<2x128xf32>
      tpu.vector_store %arg5[%c0_11, %c0_12], %13 {strides = array<i32>} : memref<2x128xf32, #tpu.memory_space<vmem>>, vector<2x128xf32>,
    } else {
    }
    %c0 = arith.constant 0 : index
    %c0_1 = arith.constant 0 : index
    %3 = vector.load %arg5[%c0, %c0_1] : memref<2x128xf32, #tpu.memory_space<vmem>>, vector<2x128xf32>
    %c0_2 = arith.constant 0 : index
    %c0_3 = arith.constant 0 : index
    %4 = vector.load %arg2[%c0_2, %c0_3] : memref<2x512xf32, #tpu.memory_space<vmem>>, vector<2x512xf32>
    %5 = arith.truncf %4 : vector<2x512xf32> to vector<2x512xbf16>
    %c0_4 = arith.constant 0 : index
    %c0_5 = arith.constant 0 : index
    %6 = vector.load %arg3[%c0_4, %c0_5] : memref<512x128xbf16, #tpu.memory_space<vmem>>, vector<512x128xbf16>
    %cst = arith.constant dense<0.000000e+00> : vector<2x128xf32>
    %7 = tpu.matmul %5, %6, %cst {dimension_numbers = #tpu.dot_dimension_numbers<[1], [0], [0], [1], [0, 0, 1, 1], [], []>} : vector<2x512xbf16>, vector<512x128xbf16>, vector<2x128xf32> -> vector<2x128xf32>
    %8 = arith.addf %3, %7 : vector<2x128xf32>
    %c0_6 = arith.constant 0 : index
    %c0_7 = arith.constant 0 : index
    %9 = vector.load %arg5[%c0_6, %c0_7] : memref<2x128xf32, #tpu.memory_space<vmem>>, vector<2x128xf32>
    tpu.vector_store %arg5[%c0_6, %c0_7], %8 {strides = array<i32>} : memref<2x128xf32, #tpu.memory_space<vmem>>, vector<2x128xf32>,
    %c0_i32_8 = arith.constant 0 : i32
    %10 = arith.cmpi eq, %arg1, %c0_i32_8 : i32
    %11 = arith.extui %10 : i1 to i32
    %c0_i32_9 = arith.constant 0 : i32
    %12 = arith.cmpi ne, %11, %c0_i32_9 : i32
    scf.if %12 {
      %c0_10 = arith.constant 0 : index
      %c0_11 = arith.constant 0 : index
      %13 = vector.load %arg5[%c0_10, %c0_11] : memref<2x128xf32, #tpu.memory_space<vmem>>, vector<2x128xf32>
      %cst_12 = arith.constant 6.250000e-02 : f32
      %14 = vector.broadcast %cst_12 : f32 to vector<2x128xf32>
      %15 = arith.mulf %13, %14 : vector<2x128xf32>
      %c0_13 = arith.constant 0 : index
      %c0_14 = arith.constant 0 : index
      %16 = vector.load %arg4[%c0_13, %c0_14] : memref<1x128xf32, #tpu.memory_space<vmem>>, vector<1x128xf32>
      %17 = vector.broadcast %16 : vector<1x128xf32> to vector<2x128xf32>
      %18 = arith.addf %15, %17 : vector<2x128xf32>
      %c0_15 = arith.constant 0 : index
      %c0_16 = arith.constant 0 : index
      %19 = vector.load %arg5[%c0_15, %c0_16] : memref<2x128xf32, #tpu.memory_space<vmem>>, vector<2x128xf32>
      tpu.vector_store %arg5[%c0_15, %c0_16], %18 {strides = array<i32>} : memref<2x128xf32, #tpu.memory_space<vmem>>, vector<2x128xf32>,
    } else {
    }
    return
  }
  func.func @transform_0(%arg0: i32, %arg1: i32) -> (i32, i32) {
    %c0_i32 = arith.constant 0 : i32
    %c0_i32_0 = arith.constant 0 : i32
    return %c0_i32, %arg1 : i32, i32
  }
  func.func @transform_1(%arg0: i32, %arg1: i32) -> (i32, i32) {
    %c0_i32 = arith.constant 0 : i32
    return %arg1, %arg0 : i32, i32
  }
  func.func @transform_2(%arg0: i32, %arg1: i32) -> (i32, i32) {
    %c0_i32 = arith.constant 0 : i32
    %c0_i32_0 = arith.constant 0 : i32
    return %c0_i32, %arg0 : i32, i32
  }
  func.func @transform_3(%arg0: i32, %arg1: i32) -> (i32, i32) {
    %c0_i32 = arith.constant 0 : i32
    %c0_i32_0 = arith.constant 0 : i32
    return %c0_i32, %arg0 : i32, i32
  }
}

module attributes {stable_mosaic.version = 11 : i64} {
  func.func @_mapping_kernel(%arg0: i32, %arg1: memref<2x512xf32, #tpu.memory_space<vmem>>, %arg2: memref<1x512x512xbf16, #tpu.memory_space<vmem>>, %arg3: memref<1x1x512xf32, #tpu.memory_space<vmem>>, %arg4: memref<2x512xf32, #tpu.memory_space<vmem>>, %arg5: memref<2x512xf32, #tpu.memory_space<vmem>>) attributes {dimension_semantics = [#tpu.dimension_semantics<arbitrary>], iteration_bounds = array<i64: 3>, scalar_prefetch = 0 : i64, scratch_operands = 1 : i64, tpu.core_type = #tpu.core_type<tc>, window_params = [{pipeline_mode = #tpu.pipeline_mode<synchronous>, transform_indices = @transform_0, window_bounds = array<i64: 2, 512>}, {transform_indices = @transform_1, window_bounds = array<i64: 1, 512, 512>}, {transform_indices = @transform_2, window_bounds = array<i64: 1, 1, 512>}, {pipeline_mode = #tpu.pipeline_mode<synchronous>, transform_indices = @transform_3, window_bounds = array<i64: 2, 512>}]} {
    %c0_i32 = arith.constant 0 : i32
    %0 = arith.cmpi eq, %arg0, %c0_i32 : i32
    %1 = arith.extui %0 : i1 to i32
    %c0_i32_0 = arith.constant 0 : i32
    %2 = arith.cmpi ne, %1, %c0_i32_0 : i32
    scf.if %2 {
      %c0_14 = arith.constant 0 : index
      %c0_15 = arith.constant 0 : index
      %23 = vector.load %arg1[%c0_14, %c0_15] : memref<2x512xf32, #tpu.memory_space<vmem>>, vector<2x512xf32>
      %24 = arith.mulf %23, %23 : vector<2x512xf32>
      %cst_16 = arith.constant dense<0.000000e+00> : vector<2xf32>
      %25 = vector.multi_reduction <add>, %24, %cst_16 [1] : vector<2x512xf32> to vector<2xf32>
      %26 = vector.shape_cast %25 : vector<2xf32> to vector<2x1xf32>
      %cst_17 = arith.constant 5.120000e+02 : f32
      %27 = vector.broadcast %cst_17 : f32 to vector<2x1xf32>
      %28 = arith.divf %26, %27 : vector<2x1xf32>
      %cst_18 = arith.constant 9.99999993E-9 : f32
      %29 = vector.broadcast %cst_18 : f32 to vector<2x1xf32>
      %30 = arith.addf %28, %29 : vector<2x1xf32>
      %31 = math.rsqrt %30 : vector<2x1xf32>
      %32 = vector.broadcast %31 : vector<2x1xf32> to vector<2x512xf32>
      %33 = arith.mulf %23, %32 : vector<2x512xf32>
      %c0_19 = arith.constant 0 : index
      %c0_20 = arith.constant 0 : index
      %34 = vector.load %arg5[%c0_19, %c0_20] : memref<2x512xf32, #tpu.memory_space<vmem>>, vector<2x512xf32>
      tpu.vector_store %arg5[%c0_19, %c0_20], %33 {strides = array<i32>} : memref<2x512xf32, #tpu.memory_space<vmem>>, vector<2x512xf32>,
    } else {
    }
    %c0 = arith.constant 0 : index
    %c0_1 = arith.constant 0 : index
    %3 = vector.load %arg5[%c0, %c0_1] : memref<2x512xf32, #tpu.memory_space<vmem>>, vector<2x512xf32>
    %4 = arith.truncf %3 : vector<2x512xf32> to vector<2x512xbf16>
    %c0_2 = arith.constant 0 : index
    %c0_3 = arith.constant 0 : index
    %c0_4 = arith.constant 0 : index
    %5 = vector.load %arg2[%c0_2, %c0_3, %c0_4] : memref<1x512x512xbf16, #tpu.memory_space<vmem>>, vector<1x512x512xbf16>
    %6 = vector.shape_cast %5 : vector<1x512x512xbf16> to vector<512x512xbf16>
    %cst = arith.constant dense<0.000000e+00> : vector<2x512xf32>
    %7 = tpu.matmul %4, %6, %cst {dimension_numbers = #tpu.dot_dimension_numbers<[1], [0], [0], [1], [0, 0, 1, 1], [], []>} : vector<2x512xbf16>, vector<512x512xbf16>, vector<2x512xf32> -> vector<2x512xf32>
    %cst_5 = arith.constant 6.250000e-02 : f32
    %8 = vector.broadcast %cst_5 : f32 to vector<2x512xf32>
    %9 = arith.mulf %7, %8 : vector<2x512xf32>
    %c0_6 = arith.constant 0 : index
    %c0_7 = arith.constant 0 : index
    %c0_8 = arith.constant 0 : index
    %10 = vector.load %arg3[%c0_6, %c0_7, %c0_8] : memref<1x1x512xf32, #tpu.memory_space<vmem>>, vector<1x1x512xf32>
    %11 = vector.shape_cast %10 : vector<1x1x512xf32> to vector<1x512xf32>
    %12 = vector.broadcast %11 : vector<1x512xf32> to vector<2x512xf32>
    %13 = arith.addf %9, %12 : vector<2x512xf32>
    %cst_9 = arith.constant 0.000000e+00 : f32
    %14 = vector.broadcast %cst_9 : f32 to vector<2x512xf32>
    %15 = arith.cmpf oge, %13, %14 : vector<2x512xf32>
    %cst_10 = arith.constant 2.000000e-01 : f32
    %16 = vector.broadcast %cst_10 : f32 to vector<2x512xf32>
    %17 = arith.mulf %16, %13 : vector<2x512xf32>
    %18 = arith.select %15, %13, %17 : vector<2x512xi1>, vector<2x512xf32>
    %c0_11 = arith.constant 0 : index
    %c0_12 = arith.constant 0 : index
    %19 = vector.load %arg5[%c0_11, %c0_12] : memref<2x512xf32, #tpu.memory_space<vmem>>, vector<2x512xf32>
    tpu.vector_store %arg5[%c0_11, %c0_12], %18 {strides = array<i32>} : memref<2x512xf32, #tpu.memory_space<vmem>>, vector<2x512xf32>,
    %c2_i32 = arith.constant 2 : i32
    %20 = arith.cmpi eq, %arg0, %c2_i32 : i32
    %21 = arith.extui %20 : i1 to i32
    %c0_i32_13 = arith.constant 0 : i32
    %22 = arith.cmpi ne, %21, %c0_i32_13 : i32
    scf.if %22 {
      %c0_14 = arith.constant 0 : index
      %c0_15 = arith.constant 0 : index
      %23 = vector.load %arg4[%c0_14, %c0_15] : memref<2x512xf32, #tpu.memory_space<vmem>>, vector<2x512xf32>
      tpu.vector_store %arg4[%c0_14, %c0_15], %18 {strides = array<i32>} : memref<2x512xf32, #tpu.memory_space<vmem>>, vector<2x512xf32>,
    } else {
    }
    return
  }
  func.func @transform_0(%arg0: i32) -> (i32, i32) {
    %c0_i32 = arith.constant 0 : i32
    %c0_i32_0 = arith.constant 0 : i32
    %c0_i32_1 = arith.constant 0 : i32
    return %c0_i32, %c0_i32_0 : i32, i32
  }
  func.func @transform_1(%arg0: i32) -> (i32, i32, i32) {
    %c0_i32 = arith.constant 0 : i32
    %c0_i32_0 = arith.constant 0 : i32
    %c0_i32_1 = arith.constant 0 : i32
    return %arg0, %c0_i32, %c0_i32_0 : i32, i32, i32
  }
  func.func @transform_2(%arg0: i32) -> (i32, i32, i32) {
    %c0_i32 = arith.constant 0 : i32
    %c0_i32_0 = arith.constant 0 : i32
    %c0_i32_1 = arith.constant 0 : i32
    return %arg0, %c0_i32, %c0_i32_0 : i32, i32, i32
  }
  func.func @transform_3(%arg0: i32) -> (i32, i32) {
    %c0_i32 = arith.constant 0 : i32
    %c0_i32_0 = arith.constant 0 : i32
    %c0_i32_1 = arith.constant 0 : i32
    return %c0_i32, %c0_i32_0 : i32, i32
  }
}

</mosaic_0001>

<llo_original>
// kernel: forward.3
$region0: #{forward.3}
  #allocation0 [shape = 'u32[]', space=smem, size = 0x4, offset = 0x4, fixed_abs, tag = 'smem constant byte address 0x4 - core index']
  #allocation1 [shape = 'u32[144,128]{1,0:T(1,128)}', space=vmem, size = 0x12000, scoped, tag = 'internal scratch']
  %s0 = inlined_call_operand.vmem [shape: f32[2,512], index: 0, kind: input, shape index: {}]
  %s1 = inlined_call_operand.vmem [shape: bf16[512,128], index: 1, kind: input, shape index: {}]
  %s2 = inlined_call_operand.vmem [shape: f32[1,128], index: 2, kind: input, shape index: {}]
  %s3 = inlined_call_operand.hbm [shape: f32[2,128], index: 3, kind: output, shape index: {}]
  %s4 = sld [smem:[#allocation0]]
  $region30: #{forward.3} parent=0
    _
  %s6 = ssub.s32 1, %s4
  %s7 = scalar_select 0, %s6, %s4
  $region1: #{forward.3} parent=0
    #allocation2 [shape = 'u8[1024]{0}', space=vmem, size = 0x400, scoped, tag = 'output window, operand 0, single buffered']
    #allocation3 [shape = 's32[1]{0}', space=sflag, size = 0x4, scoped, tag = 'scoped memory for forward.3']
    %8 = vsyncpa [#allocation3], 0
    // Predicated region
    $region2: #{forward.3} parent=1 // pred_check
      _
    $region3: #{forward.3} parent=1 // pred_check_branch
      %10 = sbr.rel (0) target = $region5
    $region4: #{forward.3} parent=1 // pred_region
      _
    $region5: #{forward.3} parent=1 // pred_fallthru
      _
    // Predicated region
    $region6: #{forward.3} parent=1 // pred_check
      _
    $region7: #{forward.3} parent=1 // pred_check_branch
      %12 = sbr.rel (0) target = $region9
    $region8: #{forward.3} parent=1 // pred_region
      _
    $region9: #{forward.3} parent=1 // pred_fallthru
      _
    // Predicated region
    $region10: #{forward.3} parent=1 // pred_check
      _
    $region11: #{forward.3} parent=1 // pred_check_branch
      %14 = sbr.rel (0) target = $region13
    $region12: #{forward.3} parent=1 // pred_region
      _
    $region13: #{forward.3} parent=1 // pred_fallthru
      _
    %p16 = scmp.eq.s32.totalorder 0, 0
    // Predicated region
    $region14: #{forward.3} parent=1 // pred_check
      %p17 = pneg %p16
    $region15: #{forward.3} parent=1 // pred_check_branch
      %19 = sbr.rel (%p17) target = $region17
    $region16: #{forward.3} parent=1 // pred_region
      %20 = vst [vmem:[#allocation2] sm:$0x3] 0.0
    $region17: #{forward.3} parent=1 // pred_fallthru
      _
    %v21 = vld [vmem:[#allocation2] sm:$0x3]
    %v22 = vld [vmem:[%s0] sm:$0xff]
    %v24 = vcombine.high %v22, %v22
    %v26 = vunpack.c.l.s4 1983009808
    %v27 = vunpack.c.0.s8 %v26
    %v28 = vlaneseq
    %v29 = vshrl.u32 %v28, 7
    %v30 = vsub.s32 %v27, %v29
    %v31 = vrot.slane %v22, %v30
    %v33 = vunpack.c.l.s4 1983009808
    %v34 = vunpack.c.0.s8 %v33
    %v35 = vlaneseq
    %v36 = vshrl.u32 %v35, 7
    %v37 = vsub.s32 %v34, %v36
    %v38 = vrot.slane %v24, %v37
    %v39 = vcombine.high %v31, %v31
    %v40 = vcombine.high %v38, %v38
    %v45 = vpack.c.bf16 %v31, %v31
    %v46 = vpack.c.bf16 %v39, %v39
    %v47 = vpack.c.bf16 %v38, %v38
    %v48 = vpack.c.bf16 %v40, %v40
    %v49 = vld [vmem:[%s1] sm:$0xf]
    %v50 = vld [vmem:[%s1 + $0x4] sm:$0xf]
    %v51 = vld [vmem:[%s1 + $0x8] sm:$0xf]
    %v52 = vld [vmem:[%s1 + $0xc] sm:$0xf]
    %v53 = vld [vmem:[%s1 + $0x10] sm:$0xf]
    %v54 = vld [vmem:[%s1 + $0x14] sm:$0xf]
    %v55 = vld [vmem:[%s1 + $0x18] sm:$0xf]
    %v56 = vld [vmem:[%s1 + $0x1c] sm:$0xf]
    %v57 = vld [vmem:[%s1 + $0x20] sm:$0xf]
    %v58 = vld [vmem:[%s1 + $0x24] sm:$0xf]
    %v59 = vld [vmem:[%s1 + $0x28] sm:$0xf]
    %v60 = vld [vmem:[%s1 + $0x2c] sm:$0xf]
    %v61 = vld [vmem:[%s1 + $0x30] sm:$0xf]
    %v62 = vld [vmem:[%s1 + $0x34] sm:$0xf]
    %v63 = vld [vmem:[%s1 + $0x38] sm:$0xf]
    %v64 = vld [vmem:[%s1 + $0x3c] sm:$0xf]
    %v65 = vld [vmem:[%s1 + $0x40] sm:$0xf]
    %v66 = vld [vmem:[%s1 + $0x44] sm:$0xf]
    %v67 = vld [vmem:[%s1 + $0x48] sm:$0xf]
    %v68 = vld [vmem:[%s1 + $0x4c] sm:$0xf]
    %v69 = vld [vmem:[%s1 + $0x50] sm:$0xf]
    %v70 = vld [vmem:[%s1 + $0x54] sm:$0xf]
    %v71 = vld [vmem:[%s1 + $0x58] sm:$0xf]
    %v72 = vld [vmem:[%s1 + $0x5c] sm:$0xf]
    %v73 = vld [vmem:[%s1 + $0x60] sm:$0xf]
    %v74 = vld [vmem:[%s1 + $0x64] sm:$0xf]
    %v75 = vld [vmem:[%s1 + $0x68] sm:$0xf]
    %v76 = vld [vmem:[%s1 + $0x6c] sm:$0xf]
    %v77 = vld [vmem:[%s1 + $0x70] sm:$0xf]
    %v78 = vld [vmem:[%s1 + $0x74] sm:$0xf]
    %v79 = vld [vmem:[%s1 + $0x78] sm:$0xf]
    %v80 = vld [vmem:[%s1 + $0x7c] sm:$0xf]
    %v81 = vld [vmem:[%s1 + $0x80] sm:$0xf]
    %v82 = vld [vmem:[%s1 + $0x84] sm:$0xf]
    %v83 = vld [vmem:[%s1 + $0x88] sm:$0xf]
    %v84 = vld [vmem:[%s1 + $0x8c] sm:$0xf]
    %v85 = vld [vmem:[%s1 + $0x90] sm:$0xf]
    %v86 = vld [vmem:[%s1 + $0x94] sm:$0xf]
    %v87 = vld [vmem:[%s1 + $0x98] sm:$0xf]
    %v88 = vld [vmem:[%s1 + $0x9c] sm:$0xf]
    %v89 = vld [vmem:[%s1 + $0xa0] sm:$0xf]
    %v90 = vld [vmem:[%s1 + $0xa4] sm:$0xf]
    %v91 = vld [vmem:[%s1 + $0xa8] sm:$0xf]
    %v92 = vld [vmem:[%s1 + $0xac] sm:$0xf]
    %v93 = vld [vmem:[%s1 + $0xb0] sm:$0xf]
    %v94 = vld [vmem:[%s1 + $0xb4] sm:$0xf]
    %v95 = vld [vmem:[%s1 + $0xb8] sm:$0xf]
    %v96 = vld [vmem:[%s1 + $0xbc] sm:$0xf]
    %v97 = vld [vmem:[%s1 + $0xc0] sm:$0xf]
    %v98 = vld [vmem:[%s1 + $0xc4] sm:$0xf]
    %v99 = vld [vmem:[%s1 + $0xc8] sm:$0xf]
    %v100 = vld [vmem:[%s1 + $0xcc] sm:$0xf]
    %v101 = vld [vmem:[%s1 + $0xd0] sm:$0xf]
    %v102 = vld [vmem:[%s1 + $0xd4] sm:$0xf]
    %v103 = vld [vmem:[%s1 + $0xd8] sm:$0xf]
    %v104 = vld [vmem:[%s1 + $0xdc] sm:$0xf]
    %v105 = vld [vmem:[%s1 + $0xe0] sm:$0xf]
    %v106 = vld [vmem:[%s1 + $0xe4] sm:$0xf]
    %v107 = vld [vmem:[%s1 + $0xe8] sm:$0xf]
    %v108 = vld [vmem:[%s1 + $0xec] sm:$0xf]
    %v109 = vld [vmem:[%s1 + $0xf0] sm:$0xf]
    %v110 = vld [vmem:[%s1 + $0xf4] sm:$0xf]
    %v111 = vld [vmem:[%s1 + $0xf8] sm:$0xf]
    %v112 = vld [vmem:[%s1 + $0xfc] sm:$0xf]
    %v177 = vunpack.c.l.b16 %v49
    %v178 = vunpack.c.l.b16 %v50
    %v179 = vunpack.c.l.b16 %v51
    %v180 = vunpack.c.l.b16 %v52
    %v181 = vunpack.c.l.b16 %v53
    %v182 = vunpack.c.l.b16 %v54
    %v183 = vunpack.c.l.b16 %v55
    %v184 = vunpack.c.l.b16 %v56
    %v185 = vunpack.c.l.b16 %v57
    %v186 = vunpack.c.l.b16 %v58
    %v187 = vunpack.c.l.b16 %v59
    %v188 = vunpack.c.l.b16 %v60
    %v189 = vunpack.c.l.b16 %v61
    %v190 = vunpack.c.l.b16 %v62
    %v191 = vunpack.c.l.b16 %v63
    %v192 = vunpack.c.l.b16 %v64
    %v193 = vunpack.c.l.b16 %v65
    %v194 = vunpack.c.l.b16 %v66
    %v195 = vunpack.c.l.b16 %v67
    %v196 = vunpack.c.l.b16 %v68
    %v197 = vunpack.c.l.b16 %v69
    %v198 = vunpack.c.l.b16 %v70
    %v199 = vunpack.c.l.b16 %v71
    %v200 = vunpack.c.l.b16 %v72
    %v201 = vunpack.c.l.b16 %v73
    %v202 = vunpack.c.l.b16 %v74
    %v203 = vunpack.c.l.b16 %v75
    %v204 = vunpack.c.l.b16 %v76
    %v205 = vunpack.c.l.b16 %v77
    %v206 = vunpack.c.l.b16 %v78
    %v207 = vunpack.c.l.b16 %v79
    %v208 = vunpack.c.l.b16 %v80
    %v209 = vunpack.c.l.b16 %v81
    %v210 = vunpack.c.l.b16 %v82
    %v211 = vunpack.c.l.b16 %v83
    %v212 = vunpack.c.l.b16 %v84
    %v213 = vunpack.c.l.b16 %v85
    %v214 = vunpack.c.l.b16 %v86
    %v215 = vunpack.c.l.b16 %v87
    %v216 = vunpack.c.l.b16 %v88
    %v217 = vunpack.c.l.b16 %v89
    %v218 = vunpack.c.l.b16 %v90
    %v219 = vunpack.c.l.b16 %v91
    %v220 = vunpack.c.l.b16 %v92
    %v221 = vunpack.c.l.b16 %v93
    %v222 = vunpack.c.l.b16 %v94
    %v223 = vunpack.c.l.b16 %v95
    %v224 = vunpack.c.l.b16 %v96
    %v225 = vunpack.c.l.b16 %v97
    %v226 = vunpack.c.l.b16 %v98
    %v227 = vunpack.c.l.b16 %v99
    %v228 = vunpack.c.l.b16 %v100
    %v229 = vunpack.c.l.b16 %v101
    %v230 = vunpack.c.l.b16 %v102
    %v231 = vunpack.c.l.b16 %v103
    %v232 = vunpack.c.l.b16 %v104
    %v233 = vunpack.c.l.b16 %v105
    %v234 = vunpack.c.l.b16 %v106
    %v235 = vunpack.c.l.b16 %v107
    %v236 = vunpack.c.l.b16 %v108
    %v237 = vunpack.c.l.b16 %v109
    %v238 = vunpack.c.l.b16 %v110
    %v239 = vunpack.c.l.b16 %v111
    %v240 = vunpack.c.l.b16 %v112
    %v241 = vpack.c.b16 %v178, %v177
    %v242 = vpack.c.b16 %v180, %v179
    %v243 = vpack.c.b16 %v182, %v181
    %v244 = vpack.c.b16 %v184, %v183
    %v245 = vpack.c.b16 %v186, %v185
    %v246 = vpack.c.b16 %v188, %v187
    %v247 = vpack.c.b16 %v190, %v189
    %v248 = vpack.c.b16 %v192, %v191
    %v249 = vpack.c.b16 %v194, %v193
    %v250 = vpack.c.b16 %v196, %v195
    %v251 = vpack.c.b16 %v198, %v197
    %v252 = vpack.c.b16 %v200, %v199
    %v253 = vpack.c.b16 %v202, %v201
    %v254 = vpack.c.b16 %v204, %v203
    %v255 = vpack.c.b16 %v206, %v205
    %v256 = vpack.c.b16 %v208, %v207
    %v257 = vpack.c.b16 %v210, %v209
    %v258 = vpack.c.b16 %v212, %v211
    %v259 = vpack.c.b16 %v214, %v213
    %v260 = vpack.c.b16 %v216, %v215
    %v261 = vpack.c.b16 %v218, %v217
    %v262 = vpack.c.b16 %v220, %v219
    %v263 = vpack.c.b16 %v222, %v221
    %v264 = vpack.c.b16 %v224, %v223
    %v265 = vpack.c.b16 %v226, %v225
    %v266 = vpack.c.b16 %v228, %v227
    %v267 = vpack.c.b16 %v230, %v229
    %v268 = vpack.c.b16 %v232, %v231
    %v269 = vpack.c.b16 %v234, %v233
    %v270 = vpack.c.b16 %v236, %v235
    %v271 = vpack.c.b16 %v238, %v237
    %v272 = vpack.c.b16 %v240, %v239
    %305 = vmatprep.subr.bf16.mxu0 0
    %306 = vmatpush1.bf16.msra.mxu0 %v241
    %307 = vmatprep.subr.bf16.mxu0 0
    %308 = vmatpush1.bf16.msra.mxu0 %v242
    %309 = vmatprep.subr.bf16.mxu0 0
    %310 = vmatpush1.bf16.msra.mxu0 %v243
    %311 = vmatprep.subr.bf16.mxu0 0
    %312 = vmatpush1.bf16.msra.mxu0 %v244
    %313 = vmatprep.subr.bf16.mxu0 0
    %314 = vmatpush1.bf16.msra.mxu0 %v245
    %315 = vmatprep.subr.bf16.mxu0 0
    %316 = vmatpush1.bf16.msra.mxu0 %v246
    %317 = vmatprep.subr.bf16.mxu0 0
    %318 = vmatpush1.bf16.msra.mxu0 %v247
    %319 = vmatprep.subr.bf16.mxu0 0
    %320 = vmatpush1.bf16.msra.mxu0 %v248
    %321 = vmatprep.subr.bf16.mxu0 0
    %322 = vmatpush1.bf16.msra.mxu0 %v249
    %323 = vmatprep.subr.bf16.mxu0 0
    %324 = vmatpush1.bf16.msra.mxu0 %v250
    %325 = vmatprep.subr.bf16.mxu0 0
    %326 = vmatpush1.bf16.msra.mxu0 %v251
    %327 = vmatprep.subr.bf16.mxu0 0
    %328 = vmatpush1.bf16.msra.mxu0 %v252
    %329 = vmatprep.subr.bf16.mxu0 0
    %330 = vmatpush1.bf16.msra.mxu0 %v253
    %331 = vmatprep.subr.bf16.mxu0 0
    %332 = vmatpush1.bf16.msra.mxu0 %v254
    %333 = vmatprep.subr.bf16.mxu0 0
    %334 = vmatpush1.bf16.msra.mxu0 %v255
    %335 = vmatprep.subr.bf16.mxu0 0
    %336 = vmatpush1.bf16.msra.mxu0 %v256
    %337 = vmatprep.mubr.bf16.mxu0 %v46
    %338 = vmatmul.mubr.bf16.gmra.mrb[0].mxu0 %v45
    %v339 = vpop.f32.mrb[0].mxu0
    %v340 = vadd.f32 0.0, %v339
    %v341 = vpop.f32.mrb[0].mxu0
    %v342 = vpop.f32.mrb[0].mxu0
    %v343 = vpop.f32.mrb[0].mxu0
    %344 = vdwg.mxu0
    %345 = vmatprep.subr.bf16.mxu0 0
    %346 = vmatpush1.bf16.msra.mxu0 %v257
    %347 = vmatprep.subr.bf16.mxu0 0
    %348 = vmatpush1.bf16.msra.mxu0 %v258
    %349 = vmatprep.subr.bf16.mxu0 0
    %350 = vmatpush1.bf16.msra.mxu0 %v259
    %351 = vmatprep.subr.bf16.mxu0 0
    %352 = vmatpush1.bf16.msra.mxu0 %v260
    %353 = vmatprep.subr.bf16.mxu0 0
    %354 = vmatpush1.bf16.msra.mxu0 %v261
    %355 = vmatprep.subr.bf16.mxu0 0
    %356 = vmatpush1.bf16.msra.mxu0 %v262
    %357 = vmatprep.subr.bf16.mxu0 0
    %358 = vmatpush1.bf16.msra.mxu0 %v263
    %359 = vmatprep.subr.bf16.mxu0 0
    %360 = vmatpush1.bf16.msra.mxu0 %v264
    %361 = vmatprep.subr.bf16.mxu0 0
    %362 = vmatpush1.bf16.msra.mxu0 %v265
    %363 = vmatprep.subr.bf16.mxu0 0
    %364 = vmatpush1.bf16.msra.mxu0 %v266
    %365 = vmatprep.subr.bf16.mxu0 0
    %366 = vmatpush1.bf16.msra.mxu0 %v267
    %367 = vmatprep.subr.bf16.mxu0 0
    %368 = vmatpush1.bf16.msra.mxu0 %v268
    %369 = vmatprep.subr.bf16.mxu0 0
    %370 = vmatpush1.bf16.msra.mxu0 %v269
    %371 = vmatprep.subr.bf16.mxu0 0
    %372 = vmatpush1.bf16.msra.mxu0 %v270
    %373 = vmatprep.subr.bf16.mxu0 0
    %374 = vmatpush1.bf16.msra.mxu0 %v271
    %375 = vmatprep.subr.bf16.mxu0 0
    %376 = vmatpush1.bf16.msra.mxu0 %v272
    %377 = vmatprep.mubr.bf16.mxu0 %v48
    %378 = vmatmul.mubr.bf16.gmra.mrb[0].mxu0 %v47
    %v379 = vpop.f32.mrb[0].mxu0
    %v380 = vadd.f32 %v340, %v379
    %v381 = vpop.f32.mrb[0].mxu0
    %v382 = vpop.f32.mrb[0].mxu0
    %v383 = vpop.f32.mrb[0].mxu0
    %384 = vdwg.mxu0
    %v385 = vadd.f32 %v21, %v380
    %386 = vst [vmem:[#allocation2] sm:$0x3] %v385
    // Predicated region
    $region18: #{forward.3} parent=1 // pred_check
      %p387 = pneg %p16
    $region19: #{forward.3} parent=1 // pred_check_branch
      %389 = sbr.rel (%p387) target = $region21
    $region20: #{forward.3} parent=1 // pred_region
      %v390 = vld [vmem:[#allocation2] sm:$0x3]
      %v391 = vmul.f32 %v390, 0.0625
      %v392 = vld [vmem:[%s2] sm:$0x1]
      %v394 = vlaneseq
      %v395 = vshrl.u32 %v394, 7
      %v396 = vsub.s32 0, %v395
      %v397 = vrot.slane %v392, %v396
      %v399 = vadd.f32 %v391, %v397
      %400 = vst [vmem:[#allocation2] sm:$0x3] %v399
    $region21: #{forward.3} parent=1 // pred_fallthru
      _
    // Predicated region
    $region22: #{forward.3} parent=1 // pred_check
      _
    $region23: #{forward.3} parent=1 // pred_check_branch
      %402 = sbr.rel (0) target = $region25
    $region24: #{forward.3} parent=1 // pred_region
      %s404 = ssub.s32 32, 32
      %405 = vsyncadd [#allocation3], %s404
      %s407 = sshll.u32 [#allocation2], 4
      %s408 = int_to_ptr.vmem [resolvable:$true] %s407
      %410 = dma.vmem_to_hbm [thread:$0]  %s408, 32, %s3, [#allocation3]
    $region25: #{forward.3} parent=1 // pred_fallthru
      _
    // Predicated region
    $region26: #{forward.3} parent=1 // pred_check
      _
    $region27: #{forward.3} parent=1 // pred_check_branch
      %412 = sbr.rel (0) target = $region29
    $region28: #{forward.3} parent=1 // pred_region
      %413 = dma.done [#allocation3], 32
    $region29: #{forward.3} parent=1 // pred_fallthru
      _
    %414 = vsyncpa [#allocation3], 1

// kernel: forward.2
$region0: #{forward.2}
  #allocation0 [shape = 'u32[]', space=smem, size = 0x4, offset = 0x4, fixed_abs, tag = 'smem constant byte address 0x4 - core index']
  #allocation1 [shape = 'u32[144,128]{1,0:T(1,128)}', space=vmem, size = 0x12000, scoped, tag = 'internal scratch']
  #allocation2 [shape = 'f32[2,512]{1,0:T(2,128)}', space=vmem, size = 0x1000, scoped, tag = 'scratch operand']
  %s0 = inlined_call_operand.hbm [shape: f32[2,512], index: 0, kind: input, shape index: {}]
  %s1 = inlined_call_operand.hbm [shape: bf16[3,512,512], index: 1, kind: input, shape index: {}]
  %s2 = inlined_call_operand.hbm [shape: f32[3,1,512], index: 2, kind: input, shape index: {}]
  %s3 = inlined_call_operand.vmem [shape: f32[2,512], index: 3, kind: output, shape index: {}]
  %s4 = sld [smem:[#allocation0]]
  $region65: #{forward.2} parent=0
    _
  %s6 = ssub.s32 1, %s4
  %s7 = scalar_select 0, %s6, %s4
  $region1: #{forward.2} parent=0
    #allocation3 [shape = 'u8[4096]{0}', space=vmem, size = 0x1000, scoped, tag = 'input window, operand 0, single buffered']
    #allocation4 [shape = 's32[2]{0}', space=sflag, size = 0x8, scoped, tag = 'scoped memory for forward.2']
    #allocation5 [shape = 'u8[1048576]{0}', space=vmem, size = 0x100000, scoped, tag = 'input window, operand 1']
    #allocation6 [shape = 's32[2]{0}', space=sflag, size = 0x8, scoped, tag = 'scoped memory for forward.2']
    #allocation7 [shape = 'u8[4096]{0}', space=vmem, size = 0x1000, scoped, tag = 'input window, operand 2']
    %8 = vsyncpa [#allocation4], 0
    %9 = vsyncpa [#allocation6], 0
    %s10 = scalar_lea.sflag [#allocation6], 1
    %11 = vsyncpa %s10, 0
    loop: start=0, step=1, limit=5
    $region2: #{forward.2} parent=1 // loop_pre_header
      _
    $region3: #{forward.2} parent=1 // loop_header
      %s13 = sphi 0, %s17
      %p14 = scmp.ge.s32.totalorder %s13, 5
      %s21 = sphi 0, %s21
      %s23 = sphi 0, %s21
      %s24 = sphi 0, %s23
      %s38 = sphi 0, %s24
      %s44 = sphi 0, %s46
      %s47 = sphi 0, %s44
      %s48 = sphi 0, %s47
      %s64 = sphi 0, %s48
      %s70 = sphi 0, %s72
      %s73 = sphi 0, %s70
      %s74 = sphi 0, %s73
      %s90 = sphi 0, %s74
      %s94 = sphi 0, %s94
      %s96 = sphi 0, %s94
      %s97 = sphi 0, %s96
      %s111 = sphi 0, %s97
    $region4: #{forward.2} parent=1 // loop_header_branch
      %16 = sbr.rel (%p14) target = $region8
    $region5: #{forward.2} parent=1 // loop_body
      %s18 = ssub.s32 %s13, 1
      %s19 = ssub.s32 %s13, 2
      %s20 = sadd.s32 %s13, 1
      %s22 = sadd.s32 %s21, 1
      %p25 = scmp.eq.s32.totalorder %s13, 2
      %p26 = scmp.ne.s32.totalorder %s21, %s23
      %p27 = scmp.eq.s32.totalorder %s13, 0
      %p28 = por %p26, %p27
      %p29 = scmp.ne.s32.totalorder %s21, %s23
      %p30 = scmp.eq.s32.totalorder %s18, 2
      %p31 = por %p29, %p30
      %p32 = scmp.ne.s32.totalorder %s23, %s24
      %p33 = scmp.eq.s32.totalorder %s18, 0
      %p34 = por %p32, %p33
      %p35 = scmp.ne.s32.totalorder %s23, %s24
      %p36 = scmp.eq.s32.totalorder %s19, 2
      %p37 = por %p35, %p36
      %p39 = scmp.ne.s32.totalorder %s24, %s38
      %p40 = scmp.eq.s32.totalorder %s19, 0
      %p41 = por %p39, %p40
      %s42 = ssub.s32 %s13, %s20
      %p43 = scmp.eq.s32.totalorder %s42, 0
      %s45 = sadd.s32 %s44, 1
      %s46 = scalar_select %p43, %s44, %s45
      %p49 = pneg %p43
      %p50 = scmp.eq.s32.totalorder %s13, 2
      %p51 = por %p49, %p50
      %p52 = scmp.ne.s32.totalorder %s44, %s47
      %p53 = scmp.eq.s32.totalorder %s13, 0
      %p54 = por %p52, %p53
      %p55 = scmp.ne.s32.totalorder %s44, %s47
      %p56 = scmp.eq.s32.totalorder %s18, 2
      %p57 = por %p55, %p56
      %p58 = scmp.ne.s32.totalorder %s47, %s48
      %p59 = scmp.eq.s32.totalorder %s18, 0
      %p60 = por %p58, %p59
      %p61 = scmp.ne.s32.totalorder %s47, %s48
      %p62 = scmp.eq.s32.totalorder %s19, 2
      %p63 = por %p61, %p62
      %p65 = scmp.ne.s32.totalorder %s48, %s64
      %p66 = scmp.eq.s32.totalorder %s19, 0
      %p67 = por %p65, %p66
      %s68 = ssub.s32 %s13, %s20
      %p69 = scmp.eq.s32.totalorder %s68, 0
      %s71 = sadd.s32 %s70, 1
      %s72 = scalar_select %p69, %s70, %s71
      %p75 = pneg %p69
      %p76 = scmp.eq.s32.totalorder %s13, 2
      %p77 = por %p75, %p76
      %p78 = scmp.ne.s32.totalorder %s70, %s73
      %p79 = scmp.eq.s32.totalorder %s13, 0
      %p80 = por %p78, %p79
      %p81 = scmp.ne.s32.totalorder %s70, %s73
      %p82 = scmp.eq.s32.totalorder %s18, 2
      %p83 = por %p81, %p82
      %p84 = scmp.ne.s32.totalorder %s73, %s74
      %p85 = scmp.eq.s32.totalorder %s18, 0
      %p86 = por %p84, %p85
      %p87 = scmp.ne.s32.totalorder %s73, %s74
      %p88 = scmp.eq.s32.totalorder %s19, 2
      %p89 = por %p87, %p88
      %p91 = scmp.ne.s32.totalorder %s74, %s90
      %p92 = scmp.eq.s32.totalorder %s19, 0
      %p93 = por %p91, %p92
      %s95 = sadd.s32 %s94, 1
      %p98 = scmp.eq.s32.totalorder %s13, 2
      %p99 = scmp.ne.s32.totalorder %s94, %s96
      %p100 = scmp.eq.s32.totalorder %s13, 0
      %p101 = por %p99, %p100
      %p102 = scmp.ne.s32.totalorder %s94, %s96
      %p103 = scmp.eq.s32.totalorder %s18, 2
      %p104 = por %p102, %p103
      %p105 = scmp.ne.s32.totalorder %s96, %s97
      %p106 = scmp.eq.s32.totalorder %s18, 0
      %p107 = por %p105, %p106
      %p108 = scmp.ne.s32.totalorder %s96, %s97
      %p109 = scmp.eq.s32.totalorder %s19, 2
      %p110 = por %p108, %p109
      %p112 = scmp.ne.s32.totalorder %s97, %s111
      %p113 = scmp.eq.s32.totalorder %s19, 0
      %p114 = por %p112, %p113
      %p115 = scmp.le.s32.totalorder 1, %s13
      %p116 = scmp.lt.s32.totalorder %s13, 4
      %p117 = pnand %p115, %p116
      %p118 = pneg %p117
      // Predicated region
      $region9: #{forward.2} parent=5 // pred_check
        _
      $region10: #{forward.2} parent=5 // pred_check_branch
        %120 = sbr.rel (%p117) target = $region12
      $region11: #{forward.2} parent=5 // pred_region
        %s121 = ssub.s32 %s13, 1
        // Predicated region
        $region13: #{forward.2} parent=11 // pred_check
          %p122 = pneg %p34
        $region14: #{forward.2} parent=11 // pred_check_branch
          %124 = sbr.rel (%p122) target = $region16
        $region15: #{forward.2} parent=11 // pred_region
          %s126 = ssub.s32 128, 128
          %127 = vsyncadd [#allocation4], %s126
          %s129 = sshll.u32 [#allocation3], 4
          %s130 = int_to_ptr.vmem [resolvable:$true] %s129
          %132 = dma.hbm_to_vmem [thread:$0]  %s0, 128, %s130, [#allocation4]
        $region16: #{forward.2} parent=11 // pred_fallthru
          _
      $region12: #{forward.2} parent=5 // pred_fallthru
        _
      %p133 = scmp.lt.s32.totalorder %s13, 3
      // Predicated region
      $region17: #{forward.2} parent=5 // pred_check
        %p134 = pneg %p133
      $region18: #{forward.2} parent=5 // pred_check_branch
        %136 = sbr.rel (%p134) target = $region20
      $region19: #{forward.2} parent=5 // pred_region
        // Predicated region
        $region21: #{forward.2} parent=19 // pred_check
          %p137 = pneg %p54
        $region22: #{forward.2} parent=19 // pred_check_branch
          %139 = sbr.rel (%p137) target = $region24
        $region23: #{forward.2} parent=19 // pred_region
          %s140 = sand.u32 %s13, 1
          %s141 = scalar_lea.sflag [#allocation6], %s140
          %s142 = sand.u32 %s44, 1
          %s143 = smul.addr %s142, 1024
          %s144 = scalar_lea.vmem [#allocation5], %s143
          %s146 = ssub.s32 16384, 16384
          %147 = vsyncadd %s141, %s146
          %s148 = smul.addr %s13, 256
          %s149 = smul.addr %s148, 64
          %s150 = scalar_lea.hbm %s1, %s149
          %s151 = sshll.u32 %s144, 4
          %s152 = int_to_ptr.vmem [resolvable:$true] %s151
          %157 = dma.hbm_to_vmem [thread:$0]  %s150, 16384, %s152, %s141, 256, 256, 16
        $region24: #{forward.2} parent=19 // pred_fallthru
          _
        // Predicated region
        $region25: #{forward.2} parent=19 // pred_check
          %p158 = pneg %p80
        $region26: #{forward.2} parent=19 // pred_check_branch
          %160 = sbr.rel (%p158) target = $region28
        $region27: #{forward.2} parent=19 // pred_region
          %s161 = sand.u32 %s13, 1
          %s162 = scalar_lea.sflag [#allocation6], %s161
          %s163 = sand.u32 %s70, 1
          %s164 = smul.addr %s163, 4
          %s165 = scalar_lea.vmem [#allocation7], %s164
          %s167 = ssub.s32 64, 64
          %168 = vsyncadd %s162, %s167
          %s169 = smul.addr %s13, 4
          %s170 = smul.addr %s169, 16
          %s171 = scalar_lea.hbm %s2, %s170
          %s173 = sshll.u32 %s165, 4
          %s174 = int_to_ptr.vmem [resolvable:$true] %s173
          %176 = dma.hbm_to_vmem [thread:$0]  %s171, 64, %s174, %s162
        $region28: #{forward.2} parent=19 // pred_fallthru
          _
      $region20: #{forward.2} parent=5 // pred_fallthru
        _
      %p177 = scmp.le.s32.totalorder 1, %s13
      %p178 = scmp.lt.s32.totalorder %s13, 4
      %p179 = pnand %p177, %p178
      %p180 = pneg %p179
      // Predicated region
      $region29: #{forward.2} parent=5 // pred_check
        _
      $region30: #{forward.2} parent=5 // pred_check_branch
        %182 = sbr.rel (%p179) target = $region32
      $region31: #{forward.2} parent=5 // pred_region
        %s183 = ssub.s32 %s13, 1
        // Predicated region
        $region33: #{forward.2} parent=31 // pred_check
          %p184 = pneg %p34
        $region34: #{forward.2} parent=31 // pred_check_branch
          %186 = sbr.rel (%p184) target = $region36
        $region35: #{forward.2} parent=31 // pred_region
          %187 = dma.done [#allocation4], 128
        $region36: #{forward.2} parent=31 // pred_fallthru
          _
        %s188 = sand.u32 %s18, 1
        %s189 = scalar_lea.sflag [#allocation6], %s188
        %s190 = sand.u32 %s47, 1
        %s191 = smul.addr %s190, 1024
        %s192 = scalar_lea.vmem [#allocation5], %s191
        // Predicated region
        $region37: #{forward.2} parent=31 // pred_check
          %p193 = pneg %p60
        $region38: #{forward.2} parent=31 // pred_check_branch
          %195 = sbr.rel (%p193) target = $region40
        $region39: #{forward.2} parent=31 // pred_region
          %196 = dma.done %s189, 16384
        $region40: #{forward.2} parent=31 // pred_fallthru
          _
        %s197 = sand.u32 %s18, 1
        %s198 = scalar_lea.sflag [#allocation6], %s197
        %s199 = sand.u32 %s73, 1
        %s200 = smul.addr %s199, 4
        %s201 = scalar_lea.vmem [#allocation7], %s200
        // Predicated region
        $region41: #{forward.2} parent=31 // pred_check
          %p202 = pneg %p86
        $region42: #{forward.2} parent=31 // pred_check_branch
          %204 = sbr.rel (%p202) target = $region44
        $region43: #{forward.2} parent=31 // pred_region
          %205 = dma.done %s198, 64
        $region44: #{forward.2} parent=31 // pred_fallthru
          _
        %p206 = pneg %p34
        %p207 = pneg %p31
        %s208 = sand.u32 %s18, 1
        %s209 = scalar_lea.sflag [#allocation6], %s208
        %s210 = sand.u32 %s47, 1
        %s211 = smul.addr %s210, 1024
        %s212 = scalar_lea.vmem [#allocation5], %s211
        %p213 = pneg %p60
        %p214 = pneg %p57
        %s215 = sand.u32 %s18, 1
        %s216 = scalar_lea.sflag [#allocation6], %s215
        %s217 = sand.u32 %s73, 1
        %s218 = smul.addr %s217, 4
        %s219 = scalar_lea.vmem [#allocation7], %s218
        %p220 = pneg %p86
        %p221 = pneg %p83
        %p222 = pneg %p107
        %p223 = pneg %p104
        %p224 = scmp.eq.s32.totalorder %s18, 0
        // Predicated region
        $region45: #{forward.2} parent=31 // pred_check
          %p225 = pneg %p224
        $region46: #{forward.2} parent=31 // pred_check_branch
          %227 = sbr.rel (%p225) target = $region48
        $region47: #{forward.2} parent=31 // pred_region
          %v228 = vld [vmem:[#allocation3] sm:$0xff]
          %v229 = vmul.f32 %v228, %v228
          %v231 = vcombine.high %v229, %v229
          %v233 = vunpack.c.l.s4 1983009808
          %v234 = vunpack.c.0.s8 %v233
          %v235 = vlaneseq
          %v236 = vshrl.u32 %v235, 7
          %v237 = vsub.s32 %v234, %v236
          %v238 = vrot.slane %v229, %v237
          %v240 = vunpack.c.l.s4 1983009808
          %v241 = vunpack.c.0.s8 %v240
          %v242 = vlaneseq
          %v243 = vshrl.u32 %v242, 7
          %v244 = vsub.s32 %v241, %v243
          %v245 = vrot.slane %v231, %v244
          %v246 = vcombine.high %v238, %v238
          %v247 = vcombine.high %v245, %v245
          %vm252 = vcmask 1041408
          %v253 = vsel %vm252, %v238, 0.0
          %v254 = vsel %vm252, %v246, 0.0
          %v255 = vadd.f32 %v253, %v254
          %v256 = vsel %vm252, %v245, 0.0
          %v257 = vadd.f32 %v255, %v256
          %v258 = vsel %vm252, %v247, 0.0
          %v259 = vadd.f32 %v257, %v258
          %260 = vadd.xlane.f32.xlu0 %v259
          %v261 = vpop.xlane.xlu0 %260
          %v262 = vrcp.pop 512.0
          %v263 = vmul.f32 %v261, %v262
          %v264 = vadd.f32 %v263, 1e-08
          %v265 = vrsqrt.pop %v264
          %v268 = vunpack.c.l.s4 269488144
          %v269 = vunpack.c.0.s8 %v268
          %v270 = vlaneseq
          %v271 = vshrl.u32 %v270, 7
          %v272 = vsub.s32 %v269, %v271
          %v273 = vrot.slane %v265, %v272
          %v275 = vmul.f32 %v228, %v273
          %276 = vst [vmem:[#allocation2] sm:$0xff] %v275
        $region48: #{forward.2} parent=31 // pred_fallthru
          _
        %v277 = vld [vmem:[#allocation2] sm:$0xff]
        %v279 = vcombine.high %v277, %v277
        %v281 = vunpack.c.l.s4 1983009808
        %v282 = vunpack.c.0.s8 %v281
        %v283 = vlaneseq
        %v284 = vshrl.u32 %v283, 7
        %v285 = vsub.s32 %v282, %v284
        %v286 = vrot.slane %v277, %v285
        %v288 = vunpack.c.l.s4 1983009808
        %v289 = vunpack.c.0.s8 %v288
        %v290 = vlaneseq
        %v291 = vshrl.u32 %v290, 7
        %v292 = vsub.s32 %v289, %v291
        %v293 = vrot.slane %v279, %v292
        %v294 = vcombine.high %v286, %v286
        %v295 = vcombine.high %v293, %v293
        %v300 = vpack.c.bf16 %v286, %v286
        %v301 = vpack.c.bf16 %v294, %v294
        %v302 = vpack.c.bf16 %v293, %v293
        %v303 = vpack.c.bf16 %v295, %v295
        %v304 = vld [vmem:[%s192] sm:$0xff]
        %v305 = vld [vmem:[%s192 + $0x8] sm:$0xff]
        %v306 = vld [vmem:[%s192 + $0x10] sm:$0xff]
        %v307 = vld [vmem:[%s192 + $0x18] sm:$0xff]
        %v308 = vld [vmem:[%s192 + $0x20] sm:$0xff]
        %v309 = vld [vmem:[%s192 + $0x28] sm:$0xff]
        %v310 = vld [vmem:[%s192 + $0x30] sm:$0xff]
        %v311 = vld [vmem:[%s192 + $0x38] sm:$0xff]
        %v312 = vld [vmem:[%s192 + $0x40] sm:$0xff]
        %v313 = vld [vmem:[%s192 + $0x48] sm:$0xff]
        %v314 = vld [vmem:[%s192 + $0x50] sm:$0xff]
        %v315 = vld [vmem:[%s192 + $0x58] sm:$0xff]
        %v316 = vld [vmem:[%s192 + $0x60] sm:$0xff]
        %v317 = vld [vmem:[%s192 + $0x68] sm:$0xff]
        %v318 = vld [vmem:[%s192 + $0x70] sm:$0xff]
        %v319 = vld [vmem:[%s192 + $0x78] sm:$0xff]
        %v320 = vld [vmem:[%s192 + $0x80] sm:$0xff]
        %v321 = vld [vmem:[%s192 + $0x88] sm:$0xff]
        %v322 = vld [vmem:[%s192 + $0x90] sm:$0xff]
        %v323 = vld [vmem:[%s192 + $0x98] sm:$0xff]
        %v324 = vld [vmem:[%s192 + $0xa0] sm:$0xff]
        %v325 = vld [vmem:[%s192 + $0xa8] sm:$0xff]
        %v326 = vld [vmem:[%s192 + $0xb0] sm:$0xff]
        %v327 = vld [vmem:[%s192 + $0xb8] sm:$0xff]
        %v328 = vld [vmem:[%s192 + $0xc0] sm:$0xff]
        %v329 = vld [vmem:[%s192 + $0xc8] sm:$0xff]
        %v330 = vld [vmem:[%s192 + $0xd0] sm:$0xff]
        %v331 = vld [vmem:[%s192 + $0xd8] sm:$0xff]
        %v332 = vld [vmem:[%s192 + $0xe0] sm:$0xff]
        %v333 = vld [vmem:[%s192 + $0xe8] sm:$0xff]
        %v334 = vld [vmem:[%s192 + $0xf0] sm:$0xff]
        %v335 = vld [vmem:[%s192 + $0xf8] sm:$0xff]
        %v336 = vld [vmem:[%s192 + $0x100] sm:$0xff]
        %v337 = vld [vmem:[%s192 + $0x108] sm:$0xff]
        %v338 = vld [vmem:[%s192 + $0x110] sm:$0xff]
        %v339 = vld [vmem:[%s192 + $0x118] sm:$0xff]
        %v340 = vld [vmem:[%s192 + $0x120] sm:$0xff]
        %v341 = vld [vmem:[%s192 + $0x128] sm:$0xff]
        %v342 = vld [vmem:[%s192 + $0x130] sm:$0xff]
        %v343 = vld [vmem:[%s192 + $0x138] sm:$0xff]
        %v344 = vld [vmem:[%s192 + $0x140] sm:$0xff]
        %v345 = vld [vmem:[%s192 + $0x148] sm:$0xff]
        %v346 = vld [vmem:[%s192 + $0x150] sm:$0xff]
        %v347 = vld [vmem:[%s192 + $0x158] sm:$0xff]
        %v348 = vld [vmem:[%s192 + $0x160] sm:$0xff]
        %v349 = vld [vmem:[%s192 + $0x168] sm:$0xff]
        %v350 = vld [vmem:[%s192 + $0x170] sm:$0xff]
        %v351 = vld [vmem:[%s192 + $0x178] sm:$0xff]
        %v352 = vld [vmem:[%s192 + $0x180] sm:$0xff]
        %v353 = vld [vmem:[%s192 + $0x188] sm:$0xff]
        %v354 = vld [vmem:[%s192 + $0x190] sm:$0xff]
        %v355 = vld [vmem:[%s192 + $0x198] sm:$0xff]
        %v356 = vld [vmem:[%s192 + $0x1a0] sm:$0xff]
        %v357 = vld [vmem:[%s192 + $0x1a8] sm:$0xff]
        %v358 = vld [vmem:[%s192 + $0x1b0] sm:$0xff]
        %v359 = vld [vmem:[%s192 + $0x1b8] sm:$0xff]
        %v360 = vld [vmem:[%s192 + $0x1c0] sm:$0xff]
        %v361 = vld [vmem:[%s192 + $0x1c8] sm:$0xff]
        %v362 = vld [vmem:[%s192 + $0x1d0] sm:$0xff]
        %v363 = vld [vmem:[%s192 + $0x1d8] sm:$0xff]
        %v364 = vld [vmem:[%s192 + $0x1e0] sm:$0xff]
        %v365 = vld [vmem:[%s192 + $0x1e8] sm:$0xff]
        %v366 = vld [vmem:[%s192 + $0x1f0] sm:$0xff]
        %v367 = vld [vmem:[%s192 + $0x1f8] sm:$0xff]
        %v368 = vld [vmem:[%s192 + $0x200] sm:$0xff]
        %v369 = vld [vmem:[%s192 + $0x208] sm:$0xff]
        %v370 = vld [vmem:[%s192 + $0x210] sm:$0xff]
        %v371 = vld [vmem:[%s192 + $0x218] sm:$0xff]
        %v372 = vld [vmem:[%s192 + $0x220] sm:$0xff]
        %v373 = vld [vmem:[%s192 + $0x228] sm:$0xff]
        %v374 = vld [vmem:[%s192 + $0x230] sm:$0xff]
        %v375 = vld [vmem:[%s192 + $0x238] sm:$0xff]
        %v376 = vld [vmem:[%s192 + $0x240] sm:$0xff]
        %v377 = vld [vmem:[%s192 + $0x248] sm:$0xff]
        %v378 = vld [vmem:[%s192 + $0x250] sm:$0xff]
        %v379 = vld [vmem:[%s192 + $0x258] sm:$0xff]
        %v380 = vld [vmem:[%s192 + $0x260] sm:$0xff]
        %v381 = vld [vmem:[%s192 + $0x268] sm:$0xff]
        %v382 = vld [vmem:[%s192 + $0x270] sm:$0xff]
        %v383 = vld [vmem:[%s192 + $0x278] sm:$0xff]
        %v384 = vld [vmem:[%s192 + $0x280] sm:$0xff]
        %v385 = vld [vmem:[%s192 + $0x288] sm:$0xff]
        %v386 = vld [vmem:[%s192 + $0x290] sm:$0xff]
        %v387 = vld [vmem:[%s192 + $0x298] sm:$0xff]
        %v388 = vld [vmem:[%s192 + $0x2a0] sm:$0xff]
        %v389 = vld [vmem:[%s192 + $0x2a8] sm:$0xff]
        %v390 = vld [vmem:[%s192 + $0x2b0] sm:$0xff]
        %v391 = vld [vmem:[%s192 + $0x2b8] sm:$0xff]
        %v392 = vld [vmem:[%s192 + $0x2c0] sm:$0xff]
        %v393 = vld [vmem:[%s192 + $0x2c8] sm:$0xff]
        %v394 = vld [vmem:[%s192 + $0x2d0] sm:$0xff]
        %v395 = vld [vmem:[%s192 + $0x2d8] sm:$0xff]
        %v396 = vld [vmem:[%s192 + $0x2e0] sm:$0xff]
        %v397 = vld [vmem:[%s192 + $0x2e8] sm:$0xff]
        %v398 = vld [vmem:[%s192 + $0x2f0] sm:$0xff]
        %v399 = vld [vmem:[%s192 + $0x2f8] sm:$0xff]
        %v400 = vld [vmem:[%s192 + $0x300] sm:$0xff]
        %v401 = vld [vmem:[%s192 + $0x308] sm:$0xff]
        %v402 = vld [vmem:[%s192 + $0x310] sm:$0xff]
        %v403 = vld [vmem:[%s192 + $0x318] sm:$0xff]
        %v404 = vld [vmem:[%s192 + $0x320] sm:$0xff]
        %v405 = vld [vmem:[%s192 + $0x328] sm:$0xff]
        %v406 = vld [vmem:[%s192 + $0x330] sm:$0xff]
        %v407 = vld [vmem:[%s192 + $0x338] sm:$0xff]
        %v408 = vld [vmem:[%s192 + $0x340] sm:$0xff]
        %v409 = vld [vmem:[%s192 + $0x348] sm:$0xff]
        %v410 = vld [vmem:[%s192 + $0x350] sm:$0xff]
        %v411 = vld [vmem:[%s192 + $0x358] sm:$0xff]
        %v412 = vld [vmem:[%s192 + $0x360] sm:$0xff]
        %v413 = vld [vmem:[%s192 + $0x368] sm:$0xff]
        %v414 = vld [vmem:[%s192 + $0x370] sm:$0xff]
        %v415 = vld [vmem:[%s192 + $0x378] sm:$0xff]
        %v416 = vld [vmem:[%s192 + $0x380] sm:$0xff]
        %v417 = vld [vmem:[%s192 + $0x388] sm:$0xff]
        %v418 = vld [vmem:[%s192 + $0x390] sm:$0xff]
        %v419 = vld [vmem:[%s192 + $0x398] sm:$0xff]
        %v420 = vld [vmem:[%s192 + $0x3a0] sm:$0xff]
        %v421 = vld [vmem:[%s192 + $0x3a8] sm:$0xff]
        %v422 = vld [vmem:[%s192 + $0x3b0] sm:$0xff]
        %v423 = vld [vmem:[%s192 + $0x3b8] sm:$0xff]
        %v424 = vld [vmem:[%s192 + $0x3c0] sm:$0xff]
        %v425 = vld [vmem:[%s192 + $0x3c8] sm:$0xff]
        %v426 = vld [vmem:[%s192 + $0x3d0] sm:$0xff]
        %v427 = vld [vmem:[%s192 + $0x3d8] sm:$0xff]
        %v428 = vld [vmem:[%s192 + $0x3e0] sm:$0xff]
        %v429 = vld [vmem:[%s192 + $0x3e8] sm:$0xff]
        %v430 = vld [vmem:[%s192 + $0x3f0] sm:$0xff]
        %v431 = vld [vmem:[%s192 + $0x3f8] sm:$0xff]
        %v560 = vunpack.c.l.b16 %v304
        %v561 = vunpack.c.h.b16 %v304
        %v562 = vunpack.c.l.b16 %v305
        %v563 = vunpack.c.h.b16 %v305
        %v564 = vunpack.c.l.b16 %v306
        %v565 = vunpack.c.h.b16 %v306
        %v566 = vunpack.c.l.b16 %v307
        %v567 = vunpack.c.h.b16 %v307
        %v568 = vunpack.c.l.b16 %v308
        %v569 = vunpack.c.h.b16 %v308
        %v570 = vunpack.c.l.b16 %v309
        %v571 = vunpack.c.h.b16 %v309
        %v572 = vunpack.c.l.b16 %v310
        %v573 = vunpack.c.h.b16 %v310
        %v574 = vunpack.c.l.b16 %v311
        %v575 = vunpack.c.h.b16 %v311
        %v576 = vunpack.c.l.b16 %v312
        %v577 = vunpack.c.h.b16 %v312
        %v578 = vunpack.c.l.b16 %v313
        %v579 = vunpack.c.h.b16 %v313
        %v580 = vunpack.c.l.b16 %v314
        %v581 = vunpack.c.h.b16 %v314
        %v582 = vunpack.c.l.b16 %v315
        %v583 = vunpack.c.h.b16 %v315
        %v584 = vunpack.c.l.b16 %v316
        %v585 = vunpack.c.h.b16 %v316
        %v586 = vunpack.c.l.b16 %v317
        %v587 = vunpack.c.h.b16 %v317
        %v588 = vunpack.c.l.b16 %v318
        %v589 = vunpack.c.h.b16 %v318
        %v590 = vunpack.c.l.b16 %v319
        %v591 = vunpack.c.h.b16 %v319
        %v592 = vunpack.c.l.b16 %v320
        %v593 = vunpack.c.h.b16 %v320
        %v594 = vunpack.c.l.b16 %v321
        %v595 = vunpack.c.h.b16 %v321
        %v596 = vunpack.c.l.b16 %v322
        %v597 = vunpack.c.h.b16 %v322
        %v598 = vunpack.c.l.b16 %v323
        %v599 = vunpack.c.h.b16 %v323
        %v600 = vunpack.c.l.b16 %v324
        %v601 = vunpack.c.h.b16 %v324
        %v602 = vunpack.c.l.b16 %v325
        %v603 = vunpack.c.h.b16 %v325
        %v604 = vunpack.c.l.b16 %v326
        %v605 = vunpack.c.h.b16 %v326
        %v606 = vunpack.c.l.b16 %v327
        %v607 = vunpack.c.h.b16 %v327
        %v608 = vunpack.c.l.b16 %v328
        %v609 = vunpack.c.h.b16 %v328
        %v610 = vunpack.c.l.b16 %v329
        %v611 = vunpack.c.h.b16 %v329
        %v612 = vunpack.c.l.b16 %v330
        %v613 = vunpack.c.h.b16 %v330
        %v614 = vunpack.c.l.b16 %v331
        %v615 = vunpack.c.h.b16 %v331
        %v616 = vunpack.c.l.b16 %v332
        %v617 = vunpack.c.h.b16 %v332
        %v618 = vunpack.c.l.b16 %v333
        %v619 = vunpack.c.h.b16 %v333
        %v620 = vunpack.c.l.b16 %v334
        %v621 = vunpack.c.h.b16 %v334
        %v622 = vunpack.c.l.b16 %v335
        %v623 = vunpack.c.h.b16 %v335
        %v624 = vunpack.c.l.b16 %v336
        %v625 = vunpack.c.h.b16 %v336
        %v626 = vunpack.c.l.b16 %v337
        %v627 = vunpack.c.h.b16 %v337
        %v628 = vunpack.c.l.b16 %v338
        %v629 = vunpack.c.h.b16 %v338
        %v630 = vunpack.c.l.b16 %v339
        %v631 = vunpack.c.h.b16 %v339
        %v632 = vunpack.c.l.b16 %v340
        %v633 = vunpack.c.h.b16 %v340
        %v634 = vunpack.c.l.b16 %v341
        %v635 = vunpack.c.h.b16 %v341
        %v636 = vunpack.c.l.b16 %v342
        %v637 = vunpack.c.h.b16 %v342
        %v638 = vunpack.c.l.b16 %v343
        %v639 = vunpack.c.h.b16 %v343
        %v640 = vunpack.c.l.b16 %v344
        %v641 = vunpack.c.h.b16 %v344
        %v642 = vunpack.c.l.b16 %v345
        %v643 = vunpack.c.h.b16 %v345
        %v644 = vunpack.c.l.b16 %v346
        %v645 = vunpack.c.h.b16 %v346
        %v646 = vunpack.c.l.b16 %v347
        %v647 = vunpack.c.h.b16 %v347
        %v648 = vunpack.c.l.b16 %v348
        %v649 = vunpack.c.h.b16 %v348
        %v650 = vunpack.c.l.b16 %v349
        %v651 = vunpack.c.h.b16 %v349
        %v652 = vunpack.c.l.b16 %v350
        %v653 = vunpack.c.h.b16 %v350
        %v654 = vunpack.c.l.b16 %v351
        %v655 = vunpack.c.h.b16 %v351
        %v656 = vunpack.c.l.b16 %v352
        %v657 = vunpack.c.h.b16 %v352
        %v658 = vunpack.c.l.b16 %v353
        %v659 = vunpack.c.h.b16 %v353
        %v660 = vunpack.c.l.b16 %v354
        %v661 = vunpack.c.h.b16 %v354
        %v662 = vunpack.c.l.b16 %v355
        %v663 = vunpack.c.h.b16 %v355
        %v664 = vunpack.c.l.b16 %v356
        %v665 = vunpack.c.h.b16 %v356
        %v666 = vunpack.c.l.b16 %v357
        %v667 = vunpack.c.h.b16 %v357
        %v668 = vunpack.c.l.b16 %v358
        %v669 = vunpack.c.h.b16 %v358
        %v670 = vunpack.c.l.b16 %v359
        %v671 = vunpack.c.h.b16 %v359
        %v672 = vunpack.c.l.b16 %v360
        %v673 = vunpack.c.h.b16 %v360
        %v674 = vunpack.c.l.b16 %v361
        %v675 = vunpack.c.h.b16 %v361
        %v676 = vunpack.c.l.b16 %v362
        %v677 = vunpack.c.h.b16 %v362
        %v678 = vunpack.c.l.b16 %v363
        %v679 = vunpack.c.h.b16 %v363
        %v680 = vunpack.c.l.b16 %v364
        %v681 = vunpack.c.h.b16 %v364
        %v682 = vunpack.c.l.b16 %v365
        %v683 = vunpack.c.h.b16 %v365
        %v684 = vunpack.c.l.b16 %v366
        %v685 = vunpack.c.h.b16 %v366
        %v686 = vunpack.c.l.b16 %v367
        %v687 = vunpack.c.h.b16 %v367
        %v688 = vunpack.c.l.b16 %v368
        %v689 = vunpack.c.h.b16 %v368
        %v690 = vunpack.c.l.b16 %v369
        %v691 = vunpack.c.h.b16 %v369
        %v692 = vunpack.c.l.b16 %v370
        %v693 = vunpack.c.h.b16 %v370
        %v694 = vunpack.c.l.b16 %v371
        %v695 = vunpack.c.h.b16 %v371
        %v696 = vunpack.c.l.b16 %v372
        %v697 = vunpack.c.h.b16 %v372
        %v698 = vunpack.c.l.b16 %v373
        %v699 = vunpack.c.h.b16 %v373
        %v700 = vunpack.c.l.b16 %v374
        %v701 = vunpack.c.h.b16 %v374
        %v702 = vunpack.c.l.b16 %v375
        %v703 = vunpack.c.h.b16 %v375
        %v704 = vunpack.c.l.b16 %v376
        %v705 = vunpack.c.h.b16 %v376
        %v706 = vunpack.c.l.b16 %v377
        %v707 = vunpack.c.h.b16 %v377
        %v708 = vunpack.c.l.b16 %v378
        %v709 = vunpack.c.h.b16 %v378
        %v710 = vunpack.c.l.b16 %v379
        %v711 = vunpack.c.h.b16 %v379
        %v712 = vunpack.c.l.b16 %v380
        %v713 = vunpack.c.h.b16 %v380
        %v714 = vunpack.c.l.b16 %v381
        %v715 = vunpack.c.h.b16 %v381
        %v716 = vunpack.c.l.b16 %v382
        %v717 = vunpack.c.h.b16 %v382
        %v718 = vunpack.c.l.b16 %v383
        %v719 = vunpack.c.h.b16 %v383
        %v720 = vunpack.c.l.b16 %v384
        %v721 = vunpack.c.h.b16 %v384
        %v722 = vunpack.c.l.b16 %v385
        %v723 = vunpack.c.h.b16 %v385
        %v724 = vunpack.c.l.b16 %v386
        %v725 = vunpack.c.h.b16 %v386
        %v726 = vunpack.c.l.b16 %v387
        %v727 = vunpack.c.h.b16 %v387
        %v728 = vunpack.c.l.b16 %v388
        %v729 = vunpack.c.h.b16 %v388
        %v730 = vunpack.c.l.b16 %v389
        %v731 = vunpack.c.h.b16 %v389
        %v732 = vunpack.c.l.b16 %v390
        %v733 = vunpack.c.h.b16 %v390
        %v734 = vunpack.c.l.b16 %v391
        %v735 = vunpack.c.h.b16 %v391
        %v736 = vunpack.c.l.b16 %v392
        %v737 = vunpack.c.h.b16 %v392
        %v738 = vunpack.c.l.b16 %v393
        %v739 = vunpack.c.h.b16 %v393
        %v740 = vunpack.c.l.b16 %v394
        %v741 = vunpack.c.h.b16 %v394
        %v742 = vunpack.c.l.b16 %v395
        %v743 = vunpack.c.h.b16 %v395
        %v744 = vunpack.c.l.b16 %v396
        %v745 = vunpack.c.h.b16 %v396
        %v746 = vunpack.c.l.b16 %v397
        %v747 = vunpack.c.h.b16 %v397
        %v748 = vunpack.c.l.b16 %v398
        %v749 = vunpack.c.h.b16 %v398
        %v750 = vunpack.c.l.b16 %v399
        %v751 = vunpack.c.h.b16 %v399
        %v752 = vunpack.c.l.b16 %v400
        %v753 = vunpack.c.h.b16 %v400
        %v754 = vunpack.c.l.b16 %v401
        %v755 = vunpack.c.h.b16 %v401
        %v756 = vunpack.c.l.b16 %v402
        %v757 = vunpack.c.h.b16 %v402
        %v758 = vunpack.c.l.b16 %v403
        %v759 = vunpack.c.h.b16 %v403
        %v760 = vunpack.c.l.b16 %v404
        %v761 = vunpack.c.h.b16 %v404
        %v762 = vunpack.c.l.b16 %v405
        %v763 = vunpack.c.h.b16 %v405
        %v764 = vunpack.c.l.b16 %v406
        %v765 = vunpack.c.h.b16 %v406
        %v766 = vunpack.c.l.b16 %v407
        %v767 = vunpack.c.h.b16 %v407
        %v768 = vunpack.c.l.b16 %v408
        %v769 = vunpack.c.h.b16 %v408
        %v770 = vunpack.c.l.b16 %v409
        %v771 = vunpack.c.h.b16 %v409
        %v772 = vunpack.c.l.b16 %v410
        %v773 = vunpack.c.h.b16 %v410
        %v774 = vunpack.c.l.b16 %v411
        %v775 = vunpack.c.h.b16 %v411
        %v776 = vunpack.c.l.b16 %v412
        %v777 = vunpack.c.h.b16 %v412
        %v778 = vunpack.c.l.b16 %v413
        %v779 = vunpack.c.h.b16 %v413
        %v780 = vunpack.c.l.b16 %v414
        %v781 = vunpack.c.h.b16 %v414
        %v782 = vunpack.c.l.b16 %v415
        %v783 = vunpack.c.h.b16 %v415
        %v784 = vunpack.c.l.b16 %v416
        %v785 = vunpack.c.h.b16 %v416
        %v786 = vunpack.c.l.b16 %v417
        %v787 = vunpack.c.h.b16 %v417
        %v788 = vunpack.c.l.b16 %v418
        %v789 = vunpack.c.h.b16 %v418
        %v790 = vunpack.c.l.b16 %v419
        %v791 = vunpack.c.h.b16 %v419
        %v792 = vunpack.c.l.b16 %v420
        %v793 = vunpack.c.h.b16 %v420
        %v794 = vunpack.c.l.b16 %v421
        %v795 = vunpack.c.h.b16 %v421
        %v796 = vunpack.c.l.b16 %v422
        %v797 = vunpack.c.h.b16 %v422
        %v798 = vunpack.c.l.b16 %v423
        %v799 = vunpack.c.h.b16 %v423
        %v800 = vunpack.c.l.b16 %v424
        %v801 = vunpack.c.h.b16 %v424
        %v802 = vunpack.c.l.b16 %v425
        %v803 = vunpack.c.h.b16 %v425
        %v804 = vunpack.c.l.b16 %v426
        %v805 = vunpack.c.h.b16 %v426
        %v806 = vunpack.c.l.b16 %v427
        %v807 = vunpack.c.h.b16 %v427
        %v808 = vunpack.c.l.b16 %v428
        %v809 = vunpack.c.h.b16 %v428
        %v810 = vunpack.c.l.b16 %v429
        %v811 = vunpack.c.h.b16 %v429
        %v812 = vunpack.c.l.b16 %v430
        %v813 = vunpack.c.h.b16 %v430
        %v814 = vunpack.c.l.b16 %v431
        %v815 = vunpack.c.h.b16 %v431
        %v816 = vpack.c.b16 %v564, %v560
        %v817 = vpack.c.b16 %v565, %v561
        %v818 = vpack.c.b16 %v566, %v562
        %v819 = vpack.c.b16 %v567, %v563
        %v820 = vpack.c.b16 %v572, %v568
        %v821 = vpack.c.b16 %v573, %v569
        %v822 = vpack.c.b16 %v574, %v570
        %v823 = vpack.c.b16 %v575, %v571
        %v824 = vpack.c.b16 %v580, %v576
        %v825 = vpack.c.b16 %v581, %v577
        %v826 = vpack.c.b16 %v582, %v578
        %v827 = vpack.c.b16 %v583, %v579
        %v828 = vpack.c.b16 %v588, %v584
        %v829 = vpack.c.b16 %v589, %v585
        %v830 = vpack.c.b16 %v590, %v586
        %v831 = vpack.c.b16 %v591, %v587
        %v832 = vpack.c.b16 %v596, %v592
        %v833 = vpack.c.b16 %v597, %v593
        %v834 = vpack.c.b16 %v598, %v594
        %v835 = vpack.c.b16 %v599, %v595
        %v836 = vpack.c.b16 %v604, %v600
        %v837 = vpack.c.b16 %v605, %v601
        %v838 = vpack.c.b16 %v606, %v602
        %v839 = vpack.c.b16 %v607, %v603
        %v840 = vpack.c.b16 %v612, %v608
        %v841 = vpack.c.b16 %v613, %v609
        %v842 = vpack.c.b16 %v614, %v610
        %v843 = vpack.c.b16 %v615, %v611
        %v844 = vpack.c.b16 %v620, %v616
        %v845 = vpack.c.b16 %v621, %v617
        %v846 = vpack.c.b16 %v622, %v618
        %v847 = vpack.c.b16 %v623, %v619
        %v848 = vpack.c.b16 %v628, %v624
        %v849 = vpack.c.b16 %v629, %v625
        %v850 = vpack.c.b16 %v630, %v626
        %v851 = vpack.c.b16 %v631, %v627
        %v852 = vpack.c.b16 %v636, %v632
        %v853 = vpack.c.b16 %v637, %v633
        %v854 = vpack.c.b16 %v638, %v634
        %v855 = vpack.c.b16 %v639, %v635
        %v856 = vpack.c.b16 %v644, %v640
        %v857 = vpack.c.b16 %v645, %v641
        %v858 = vpack.c.b16 %v646, %v642
        %v859 = vpack.c.b16 %v647, %v643
        %v860 = vpack.c.b16 %v652, %v648
        %v861 = vpack.c.b16 %v653, %v649
        %v862 = vpack.c.b16 %v654, %v650
        %v863 = vpack.c.b16 %v655, %v651
        %v864 = vpack.c.b16 %v660, %v656
        %v865 = vpack.c.b16 %v661, %v657
        %v866 = vpack.c.b16 %v662, %v658
        %v867 = vpack.c.b16 %v663, %v659
        %v868 = vpack.c.b16 %v668, %v664
        %v869 = vpack.c.b16 %v669, %v665
        %v870 = vpack.c.b16 %v670, %v666
        %v871 = vpack.c.b16 %v671, %v667
        %v872 = vpack.c.b16 %v676, %v672
        %v873 = vpack.c.b16 %v677, %v673
        %v874 = vpack.c.b16 %v678, %v674
        %v875 = vpack.c.b16 %v679, %v675
        %v876 = vpack.c.b16 %v684, %v680
        %v877 = vpack.c.b16 %v685, %v681
        %v878 = vpack.c.b16 %v686, %v682
        %v879 = vpack.c.b16 %v687, %v683
        %v880 = vpack.c.b16 %v692, %v688
        %v881 = vpack.c.b16 %v693, %v689
        %v882 = vpack.c.b16 %v694, %v690
        %v883 = vpack.c.b16 %v695, %v691
        %v884 = vpack.c.b16 %v700, %v696
        %v885 = vpack.c.b16 %v701, %v697
        %v886 = vpack.c.b16 %v702, %v698
        %v887 = vpack.c.b16 %v703, %v699
        %v888 = vpack.c.b16 %v708, %v704
        %v889 = vpack.c.b16 %v709, %v705
        %v890 = vpack.c.b16 %v710, %v706
        %v891 = vpack.c.b16 %v711, %v707
        %v892 = vpack.c.b16 %v716, %v712
        %v893 = vpack.c.b16 %v717, %v713
        %v894 = vpack.c.b16 %v718, %v714
        %v895 = vpack.c.b16 %v719, %v715
        %v896 = vpack.c.b16 %v724, %v720
        %v897 = vpack.c.b16 %v725, %v721
        %v898 = vpack.c.b16 %v726, %v722
        %v899 = vpack.c.b16 %v727, %v723
        %v900 = vpack.c.b16 %v732, %v728
        %v901 = vpack.c.b16 %v733, %v729
        %v902 = vpack.c.b16 %v734, %v730
        %v903 = vpack.c.b16 %v735, %v731
        %v904 = vpack.c.b16 %v740, %v736
        %v905 = vpack.c.b16 %v741, %v737
        %v906 = vpack.c.b16 %v742, %v738
        %v907 = vpack.c.b16 %v743, %v739
        %v908 = vpack.c.b16 %v748, %v744
        %v909 = vpack.c.b16 %v749, %v745
        %v910 = vpack.c.b16 %v750, %v746
        %v911 = vpack.c.b16 %v751, %v747
        %v912 = vpack.c.b16 %v756, %v752
        %v913 = vpack.c.b16 %v757, %v753
        %v914 = vpack.c.b16 %v758, %v754
        %v915 = vpack.c.b16 %v759, %v755
        %v916 = vpack.c.b16 %v764, %v760
        %v917 = vpack.c.b16 %v765, %v761
        %v918 = vpack.c.b16 %v766, %v762
        %v919 = vpack.c.b16 %v767, %v763
        %v920 = vpack.c.b16 %v772, %v768
        %v921 = vpack.c.b16 %v773, %v769
        %v922 = vpack.c.b16 %v774, %v770
        %v923 = vpack.c.b16 %v775, %v771
        %v924 = vpack.c.b16 %v780, %v776
        %v925 = vpack.c.b16 %v781, %v777
        %v926 = vpack.c.b16 %v782, %v778
        %v927 = vpack.c.b16 %v783, %v779
        %v928 = vpack.c.b16 %v788, %v784
        %v929 = vpack.c.b16 %v789, %v785
        %v930 = vpack.c.b16 %v790, %v786
        %v931 = vpack.c.b16 %v791, %v787
        %v932 = vpack.c.b16 %v796, %v792
        %v933 = vpack.c.b16 %v797, %v793
        %v934 = vpack.c.b16 %v798, %v794
        %v935 = vpack.c.b16 %v799, %v795
        %v936 = vpack.c.b16 %v804, %v800
        %v937 = vpack.c.b16 %v805, %v801
        %v938 = vpack.c.b16 %v806, %v802
        %v939 = vpack.c.b16 %v807, %v803
        %v940 = vpack.c.b16 %v812, %v808
        %v941 = vpack.c.b16 %v813, %v809
        %v942 = vpack.c.b16 %v814, %v810
        %v943 = vpack.c.b16 %v815, %v811
        %1072 = vmatprep.subr.bf16.mxu0 %v817
        %1073 = vmatpush1.bf16.msra.mxu0 %v816
        %1074 = vmatprep.subr.bf16.mxu0 %v821
        %1075 = vmatpush1.bf16.msra.mxu0 %v820
        %1076 = vmatprep.subr.bf16.mxu0 %v825
        %1077 = vmatpush1.bf16.msra.mxu0 %v824
        %1078 = vmatprep.subr.bf16.mxu0 %v829
        %1079 = vmatpush1.bf16.msra.mxu0 %v828
        %1080 = vmatprep.subr.bf16.mxu0 %v833
        %1081 = vmatpush1.bf16.msra.mxu0 %v832
        %1082 = vmatprep.subr.bf16.mxu0 %v837
        %1083 = vmatpush1.bf16.msra.mxu0 %v836
        %1084 = vmatprep.subr.bf16.mxu0 %v841
        %1085 = vmatpush1.bf16.msra.mxu0 %v840
        %1086 = vmatprep.subr.bf16.mxu0 %v845
        %1087 = vmatpush1.bf16.msra.mxu0 %v844
        %1088 = vmatprep.subr.bf16.mxu0 %v849
        %1089 = vmatpush1.bf16.msra.mxu0 %v848
        %1090 = vmatprep.subr.bf16.mxu0 %v853
        %1091 = vmatpush1.bf16.msra.mxu0 %v852
        %1092 = vmatprep.subr.bf16.mxu0 %v857
        %1093 = vmatpush1.bf16.msra.mxu0 %v856
        %1094 = vmatprep.subr.bf16.mxu0 %v861
        %1095 = vmatpush1.bf16.msra.mxu0 %v860
        %1096 = vmatprep.subr.bf16.mxu0 %v865
        %1097 = vmatpush1.bf16.msra.mxu0 %v864
        %1098 = vmatprep.subr.bf16.mxu0 %v869
        %1099 = vmatpush1.bf16.msra.mxu0 %v868
        %1100 = vmatprep.subr.bf16.mxu0 %v873
        %1101 = vmatpush1.bf16.msra.mxu0 %v872
        %1102 = vmatprep.subr.bf16.mxu0 %v877
        %1103 = vmatpush1.bf16.msra.mxu0 %v876
        %1104 = vmatprep.mubr.bf16.mxu0 %v301
        %1105 = vmatmul.mubr.bf16.gmra.mrb[0].mxu0 %v300
        %v1106 = vpop.f32.mrb[0].mxu0
        %v1107 = vadd.f32 0.0, %v1106
        %v1108 = vpop.f32.mrb[0].mxu0
        %v1109 = vadd.f32 0.0, %v1108
        %v1110 = vpop.f32.mrb[0].mxu0
        %v1111 = vpop.f32.mrb[0].mxu0
        %1112 = vdwg.mxu0
        %1113 = vmatprep.subr.bf16.mxu0 %v881
        %1114 = vmatpush1.bf16.msra.mxu0 %v880
        %1115 = vmatprep.subr.bf16.mxu0 %v885
        %1116 = vmatpush1.bf16.msra.mxu0 %v884
        %1117 = vmatprep.subr.bf16.mxu0 %v889
        %1118 = vmatpush1.bf16.msra.mxu0 %v888
        %1119 = vmatprep.subr.bf16.mxu0 %v893
        %1120 = vmatpush1.bf16.msra.mxu0 %v892
        %1121 = vmatprep.subr.bf16.mxu0 %v897
        %1122 = vmatpush1.bf16.msra.mxu0 %v896
        %1123 = vmatprep.subr.bf16.mxu0 %v901
        %1124 = vmatpush1.bf16.msra.mxu0 %v900
        %1125 = vmatprep.subr.bf16.mxu0 %v905
        %1126 = vmatpush1.bf16.msra.mxu0 %v904
        %1127 = vmatprep.subr.bf16.mxu0 %v909
        %1128 = vmatpush1.bf16.msra.mxu0 %v908
        %1129 = vmatprep.subr.bf16.mxu0 %v913
        %1130 = vmatpush1.bf16.msra.mxu0 %v912
        %1131 = vmatprep.subr.bf16.mxu0 %v917
        %1132 = vmatpush1.bf16.msra.mxu0 %v916
        %1133 = vmatprep.subr.bf16.mxu0 %v921
        %1134 = vmatpush1.bf16.msra.mxu0 %v920
        %1135 = vmatprep.subr.bf16.mxu0 %v925
        %1136 = vmatpush1.bf16.msra.mxu0 %v924
        %1137 = vmatprep.subr.bf16.mxu0 %v929
        %1138 = vmatpush1.bf16.msra.mxu0 %v928
        %1139 = vmatprep.subr.bf16.mxu0 %v933
        %1140 = vmatpush1.bf16.msra.mxu0 %v932
        %1141 = vmatprep.subr.bf16.mxu0 %v937
        %1142 = vmatpush1.bf16.msra.mxu0 %v936
        %1143 = vmatprep.subr.bf16.mxu0 %v941
        %1144 = vmatpush1.bf16.msra.mxu0 %v940
        %1145 = vmatprep.mubr.bf16.mxu0 %v303
        %1146 = vmatmul.mubr.bf16.gmra.mrb[0].mxu0 %v302
        %v1147 = vpop.f32.mrb[0].mxu0
        %v1148 = vadd.f32 %v1107, %v1147
        %v1149 = vpop.f32.mrb[0].mxu0
        %v1150 = vadd.f32 %v1109, %v1149
        %v1151 = vpop.f32.mrb[0].mxu0
        %v1152 = vpop.f32.mrb[0].mxu0
        %1153 = vdwg.mxu0
        %1154 = vmatprep.subr.bf16.mxu0 %v819
        %1155 = vmatpush1.bf16.msra.mxu0 %v818
        %1156 = vmatprep.subr.bf16.mxu0 %v823
        %1157 = vmatpush1.bf16.msra.mxu0 %v822
        %1158 = vmatprep.subr.bf16.mxu0 %v827
        %1159 = vmatpush1.bf16.msra.mxu0 %v826
        %1160 = vmatprep.subr.bf16.mxu0 %v831
        %1161 = vmatpush1.bf16.msra.mxu0 %v830
        %1162 = vmatprep.subr.bf16.mxu0 %v835
        %1163 = vmatpush1.bf16.msra.mxu0 %v834
        %1164 = vmatprep.subr.bf16.mxu0 %v839
        %1165 = vmatpush1.bf16.msra.mxu0 %v838
        %1166 = vmatprep.subr.bf16.mxu0 %v843
        %1167 = vmatpush1.bf16.msra.mxu0 %v842
        %1168 = vmatprep.subr.bf16.mxu0 %v847
        %1169 = vmatpush1.bf16.msra.mxu0 %v846
        %1170 = vmatprep.subr.bf16.mxu0 %v851
        %1171 = vmatpush1.bf16.msra.mxu0 %v850
        %1172 = vmatprep.subr.bf16.mxu0 %v855
        %1173 = vmatpush1.bf16.msra.mxu0 %v854
        %1174 = vmatprep.subr.bf16.mxu0 %v859
        %1175 = vmatpush1.bf16.msra.mxu0 %v858
        %1176 = vmatprep.subr.bf16.mxu0 %v863
        %1177 = vmatpush1.bf16.msra.mxu0 %v862
        %1178 = vmatprep.subr.bf16.mxu0 %v867
        %1179 = vmatpush1.bf16.msra.mxu0 %v866
        %1180 = vmatprep.subr.bf16.mxu0 %v871
        %1181 = vmatpush1.bf16.msra.mxu0 %v870
        %1182 = vmatprep.subr.bf16.mxu0 %v875
        %1183 = vmatpush1.bf16.msra.mxu0 %v874
        %1184 = vmatprep.subr.bf16.mxu0 %v879
        %1185 = vmatpush1.bf16.msra.mxu0 %v878
        %1186 = vmatprep.mubr.bf16.mxu0 %v301
        %1187 = vmatmul.mubr.bf16.gmra.mrb[0].mxu0 %v300
        %v1188 = vpop.f32.mrb[0].mxu0
        %v1189 = vadd.f32 0.0, %v1188
        %v1190 = vpop.f32.mrb[0].mxu0
        %v1191 = vadd.f32 0.0, %v1190
        %v1192 = vpop.f32.mrb[0].mxu0
        %v1193 = vpop.f32.mrb[0].mxu0
        %1194 = vdwg.mxu0
        %1195 = vmatprep.subr.bf16.mxu0 %v883
        %1196 = vmatpush1.bf16.msra.mxu0 %v882
        %1197 = vmatprep.subr.bf16.mxu0 %v887
        %1198 = vmatpush1.bf16.msra.mxu0 %v886
        %1199 = vmatprep.subr.bf16.mxu0 %v891
        %1200 = vmatpush1.bf16.msra.mxu0 %v890
        %1201 = vmatprep.subr.bf16.mxu0 %v895
        %1202 = vmatpush1.bf16.msra.mxu0 %v894
        %1203 = vmatprep.subr.bf16.mxu0 %v899
        %1204 = vmatpush1.bf16.msra.mxu0 %v898
        %1205 = vmatprep.subr.bf16.mxu0 %v903
        %1206 = vmatpush1.bf16.msra.mxu0 %v902
        %1207 = vmatprep.subr.bf16.mxu0 %v907
        %1208 = vmatpush1.bf16.msra.mxu0 %v906
        %1209 = vmatprep.subr.bf16.mxu0 %v911
        %1210 = vmatpush1.bf16.msra.mxu0 %v910
        %1211 = vmatprep.subr.bf16.mxu0 %v915
        %1212 = vmatpush1.bf16.msra.mxu0 %v914
        %1213 = vmatprep.subr.bf16.mxu0 %v919
        %1214 = vmatpush1.bf16.msra.mxu0 %v918
        %1215 = vmatprep.subr.bf16.mxu0 %v923
        %1216 = vmatpush1.bf16.msra.mxu0 %v922
        %1217 = vmatprep.subr.bf16.mxu0 %v927
        %1218 = vmatpush1.bf16.msra.mxu0 %v926
        %1219 = vmatprep.subr.bf16.mxu0 %v931
        %1220 = vmatpush1.bf16.msra.mxu0 %v930
        %1221 = vmatprep.subr.bf16.mxu0 %v935
        %1222 = vmatpush1.bf16.msra.mxu0 %v934
        %1223 = vmatprep.subr.bf16.mxu0 %v939
        %1224 = vmatpush1.bf16.msra.mxu0 %v938
        %1225 = vmatprep.subr.bf16.mxu0 %v943
        %1226 = vmatpush1.bf16.msra.mxu0 %v942
        %1227 = vmatprep.mubr.bf16.mxu0 %v303
        %1228 = vmatmul.mubr.bf16.gmra.mrb[0].mxu0 %v302
        %v1229 = vpop.f32.mrb[0].mxu0
        %v1230 = vadd.f32 %v1189, %v1229
        %v1231 = vpop.f32.mrb[0].mxu0
        %v1232 = vadd.f32 %v1191, %v1231
        %v1233 = vpop.f32.mrb[0].mxu0
        %v1234 = vpop.f32.mrb[0].mxu0
        %1235 = vdwg.mxu0
        %v1236 = vmul.f32 %v1148, 0.0625
        %v1237 = vmul.f32 %v1150, 0.0625
        %v1238 = vmul.f32 %v1230, 0.0625
        %v1239 = vmul.f32 %v1232, 0.0625
        %v1240 = vld [vmem:[%s201] sm:$0xf]
        %v1242 = vlaneseq
        %v1243 = vshrl.u32 %v1242, 7
        %v1244 = vsub.s32 0, %v1243
        %v1245 = vrot.slane %v1240, %v1244
        %v1246 = vlaneseq
        %v1247 = vshrl.u32 %v1246, 7
        %v1248 = vsub.s32 1, %v1247
        %v1249 = vrot.slane %v1240, %v1248
        %v1250 = vlaneseq
        %v1251 = vshrl.u32 %v1250, 7
        %v1252 = vsub.s32 2, %v1251
        %v1253 = vrot.slane %v1240, %v1252
        %v1254 = vlaneseq
        %v1255 = vshrl.u32 %v1254, 7
        %v1256 = vsub.s32 3, %v1255
        %v1257 = vrot.slane %v1240, %v1256
        %v1262 = vadd.f32 %v1236, %v1245
        %v1263 = vadd.f32 %v1237, %v1249
        %v1264 = vadd.f32 %v1238, %v1253
        %v1265 = vadd.f32 %v1239, %v1257
        %vm1266 = vcmp.ge.f32.partialorder %v1262, 0.0
        %vm1267 = vcmp.ge.f32.partialorder %v1263, 0.0
        %vm1268 = vcmp.ge.f32.partialorder %v1264, 0.0
        %vm1269 = vcmp.ge.f32.partialorder %v1265, 0.0
        %v1270 = vmul.f32 %v1262, 0.2
        %v1271 = vmul.f32 %v1263, 0.2
        %v1272 = vmul.f32 %v1264, 0.2
        %v1273 = vmul.f32 %v1265, 0.2
        %v1274 = vsel %vm1266, %v1262, %v1270
        %v1275 = vsel %vm1267, %v1263, %v1271
        %v1276 = vsel %vm1268, %v1264, %v1272
        %v1277 = vsel %vm1269, %v1265, %v1273
        %v1282 = vcombine.low %v1274, %v1275
        %v1283 = vcombine.low %v1276, %v1277
        %v1285 = vunpack.c.l.s4 1983009808
        %v1286 = vunpack.c.0.s8 %v1285
        %v1287 = vlaneseq
        %v1288 = vshrl.u32 %v1287, 7
        %v1289 = vsub.s32 %v1286, %v1288
        %v1290 = vrot.slane %v1282, %v1289
        %v1292 = vunpack.c.l.s4 1983009808
        %v1293 = vunpack.c.0.s8 %v1292
        %v1294 = vlaneseq
        %v1295 = vshrl.u32 %v1294, 7
        %v1296 = vsub.s32 %v1293, %v1295
        %v1297 = vrot.slane %v1283, %v1296
        %v1298 = vcombine.low %v1290, %v1297
        %1300 = vst [vmem:[#allocation2] sm:$0xff] %v1298
        %p1301 = scmp.eq.s32.totalorder %s18, 2
        // Predicated region
        $region49: #{forward.2} parent=31 // pred_check
          %p1302 = pneg %p1301
        $region50: #{forward.2} parent=31 // pred_check_branch
          %1304 = sbr.rel (%p1302) target = $region52
        $region51: #{forward.2} parent=31 // pred_region
          %1305 = vst [vmem:[%s3] sm:$0xff] %v1298
        $region52: #{forward.2} parent=31 // pred_fallthru
          _
        // Predicated region
        $region53: #{forward.2} parent=31 // pred_check
          %p1306 = pneg %p104
        $region54: #{forward.2} parent=31 // pred_check_branch
          %1308 = sbr.rel (%p1306) target = $region56
        $region55: #{forward.2} parent=31 // pred_region
          _
        $region56: #{forward.2} parent=31 // pred_fallthru
          _
        // Predicated region
        $region57: #{forward.2} parent=31 // pred_check
          %p1309 = pneg %p104
        $region58: #{forward.2} parent=31 // pred_check_branch
          %1311 = sbr.rel (%p1309) target = $region60
        $region59: #{forward.2} parent=31 // pred_region
          _
        $region60: #{forward.2} parent=31 // pred_fallthru
          _
      $region32: #{forward.2} parent=5 // pred_fallthru
        _
      %p1312 = scmp.le.s32.totalorder 2, %s13
      // Predicated region
      $region61: #{forward.2} parent=5 // pred_check
        %p1313 = pneg %p1312
      $region62: #{forward.2} parent=5 // pred_check_branch
        %1315 = sbr.rel (%p1313) target = $region64
      $region63: #{forward.2} parent=5 // pred_region
        %s1316 = ssub.s32 %s13, 2
      $region64: #{forward.2} parent=5 // pred_fallthru
        _
    $region6: #{forward.2} parent=1 // loop_footer
      %s17 = sadd.s32 1, %s13
    $region7: #{forward.2} parent=1 // loop_footer_branch
      %12 = sbr.rel target = $region3
    $region8: #{forward.2} parent=1 // loop_exit
      _
    %1317 = vsyncpa [#allocation4], 1
    %s1318 = scalar_lea.sflag [#allocation4], 1
    %1319 = vsyncpa %s1318, 1
    %1320 = vsyncpa [#allocation6], 1
    %s1321 = scalar_lea.sflag [#allocation6], 1
    %1322 = vsyncpa %s1321, 1

</llo_original>
